<compile_context>
chip_gen: v5e
topology: v5e:2x2
jax: 0.10.0
libtpu: 0.0.40
codegen_flags: <defaults>
</compile_context>

<pallas_src>
import jax
import jax.numpy as jnp
from jax.experimental import pallas as pl
from jax.experimental.pallas import tpu as pltpu

LATENT_DIM = 128
HIDDEN = 512


def _round_up(x, m):
    return (x + m - 1) // m * m


def _pick_k_tile(k_pad128, max_tile=1024):
    """Largest multiple of 128 <= max_tile that evenly divides k_pad128."""
    for t in range(max_tile, 127, -128):
        if k_pad128 % t == 0:
            return t
    return 512


def _tla_kernel(x_ref, l_ref, w1_ref, b1_ref, w2_ref, b2_ref, out_ref, acc_ref):
    k = pl.program_id(0)

    @pl.when(k == 0)
    def _():
        acc_ref[...] = jnp.zeros_like(acc_ref)

    # Partial first-layer matmul on the current K tile (bf16 MXU, f32 acc).
    acc_ref[...] += jnp.dot(
        x_ref[...], w1_ref[...], preferred_element_type=jnp.float32)

    @pl.when(k == pl.num_programs(0) - 1)
    def _():
        # bias + ReLU
        h = jnp.maximum(acc_ref[...] + b1_ref[...], 0.0)
        # second linear (bf16 MXU, f32 acc)
        o = jnp.dot(h.astype(w2_ref.dtype), w2_ref[...],
                    preferred_element_type=jnp.float32)
        o = o + b2_ref[...]
        # chunk(2, dim=1) -> mu, lam ; fused affine latent update
        mu = o[:, :LATENT_DIM]
        lam = o[:, LATENT_DIM:]
        out_ref[...] = mu * l_ref[...] + lam


@jax.jit
def tla_forward(Lt_minus_1, xt_minus_1, x0_hat, xT, params):
    """JAX wrapper replicating TLAModule.forward (single fused Pallas call)."""
    B = Lt_minus_1.shape[0]
    input_vec = jnp.concatenate(
        [Lt_minus_1,
         xt_minus_1.reshape(B, -1),
         x0_hat.reshape(B, -1),
         xT.reshape(B, -1)], axis=1)
    K = input_vec.shape[1]

    w1, b1, w2, b2 = params

    # bf16 weights/activations halve HBM traffic; accumulation stays f32.
    x_bf = input_vec.astype(jnp.bfloat16)
    w1_bf = w1.astype(jnp.bfloat16)
    w2_bf = w2.astype(jnp.bfloat16)
    b1_f = b1.astype(jnp.float32)
    b2_f = b2.astype(jnp.float32)
    l_f = Lt_minus_1.astype(jnp.float32)

    # Pad rows to the bf16 sublane multiple (unmasked stores), K to the tile.
    # NOTE: real callers should batch many rows (>=128) per call to amortize
    # the weight stream; the padding here only fixes layout, not occupancy.
    B_pad = max(16, _round_up(B, 16))
    K_128 = _round_up(K, 128)
    tk = _pick_k_tile(K_128)
    K_pad = _round_up(K, tk)
    n_k = K_pad // tk

    x_bf = jnp.pad(x_bf, ((0, B_pad - B), (0, K_pad - K)))
    l_pad = jnp.pad(l_f, ((0, B_pad - B), (0, 0)))
    w1_bf = jnp.pad(w1_bf, ((0, K_pad - K), (0, 0)))

    grid_spec = pltpu.PrefetchScalarGridSpec(
        num_scalar_prefetch=0,
        grid=(n_k,),
        in_specs=[
            pl.BlockSpec((B_pad, tk), lambda k: (0, k)),               # x tile
            pl.BlockSpec((B_pad, LATENT_DIM), lambda k: (0, 0)),       # L (resident)
            pl.BlockSpec((tk, HIDDEN), lambda k: (k, 0)),              # W1 tile
            pl.BlockSpec((1, HIDDEN), lambda k: (0, 0)),               # b1
            pl.BlockSpec((HIDDEN, 2 * LATENT_DIM), lambda k: (0, 0)),  # W2 (resident)
            pl.BlockSpec((1, 2 * LATENT_DIM), lambda k: (0, 0)),       # b2
        ],
        out_specs=pl.BlockSpec((B_pad, LATENT_DIM), lambda k: (0, 0)),
        scratch_shapes=[pltpu.VMEM((B_pad, HIDDEN), jnp.float32)],
    )

    flops = 2 * B_pad * K_pad * HIDDEN + 2 * B_pad * HIDDEN * 2 * LATENT_DIM
    bytes_accessed = (x_bf.size * 2 + w1_bf.size * 2 + w2_bf.size * 2
                      + b1_f.size * 4 + b2_f.size * 4
                      + l_pad.size * 4 + B_pad * LATENT_DIM * 4)

    out = pl.pallas_call(
        _tla_kernel,
        out_shape=jax.ShapeDtypeStruct((B_pad, LATENT_DIM), jnp.float32),
        grid_spec=grid_spec,
        compiler_params=pltpu.CompilerParams(
            dimension_semantics=("arbitrary",),
            vmem_limit_bytes=32 * 1024 * 1024,
        ),
        cost_estimate=pl.CostEstimate(
            flops=flops, transcendentals=0, bytes_accessed=bytes_accessed),
    )(x_bf, l_pad, w1_bf, b1_f, w2_bf, b2_f)

    # TODO(synk): when invoked repeatedly with the same weights (per diffusion
    # step), keep W1/W2 VMEM-resident across calls (cross-pallas_call
    # persistence, P10) instead of re-streaming them each step.
    return out[:B]


def init_params(input_dim, key):
    """Deterministic synthetic weights matching nn.Linear shapes (f32 master)."""
    k1, k2, k3, k4 = jax.random.split(key, 4)
    w1 = jax.random.normal(k1, (input_dim, HIDDEN), jnp.float32) * 0.02
    b1 = jax.random.normal(k2, (1, HIDDEN), jnp.float32) * 0.01
    w2 = jax.random.normal(k3, (HIDDEN, 2 * LATENT_DIM), jnp.float32) * 0.02
    b2 = jax.random.normal(k4, (1, 2 * LATENT_DIM), jnp.float32) * 0.01
    return w1, b1, w2, b2


if __name__ == "__main__":
    key = jax.random.PRNGKey(0)
    kL, kxt, kx0, kxT, kp = jax.random.split(key, 5)

    B, C, H, W = 2, 4, 16, 16
    Lt_minus_1 = jax.random.normal(kL, (B, LATENT_DIM), jnp.float32)
    xt_minus_1 = jax.random.normal(kxt, (B, C, H, W), jnp.float32)
    x0_hat = jax.random.normal(kx0, (B, C, H, W), jnp.float32)
    xT = jax.random.normal(kxT, (B, C, H, W), jnp.float32)

    input_dim = LATENT_DIM + 3 * C * H * W   # 128 + 3*1024 = 3200
    params = init_params(input_dim, kp)

    out = tla_forward(Lt_minus_1, xt_minus_1, x0_hat, xT, params)
    jax.block_until_ready(out)

    # Reference in plain JAX, mirroring the kernel's bf16 quantization points
    # so the comparison is tight while validating the fused math.
    iv = jnp.concatenate(
        [Lt_minus_1, xt_minus_1.reshape(B, -1), x0_hat.reshape(B, -1),
         xT.reshape(B, -1)], axis=1)
    iv_q = iv.astype(jnp.bfloat16).astype(jnp.float32)
    w1_q = params[0].astype(jnp.bfloat16).astype(jnp.float32)
    w2_q = params[2].astype(jnp.bfloat16).astype(jnp.float32)
    h = jnp.maximum(iv_q @ w1_q + params[1], 0.0)
    h_q = h.astype(jnp.bfloat16).astype(jnp.float32)
    o = h_q @ w2_q + params[3]
    ref = o[:, :LATENT_DIM] * Lt_minus_1 + o[:, LATENT_DIM:]

    assert out.shape == (B, LATENT_DIM)
    assert bool(jnp.all(jnp.isfinite(out)))
    assert jnp.allclose(out, ref, atol=2e-2, rtol=2e-2), (
        float(jnp.max(jnp.abs(out - ref))))

    print("KERNEL_OK")
</pallas_src>

<mosaic_0001>
module attributes {stable_mosaic.version = 11 : i64} {
  func.func @_tla_kernel(%arg0: i32, %arg1: memref<16x640xbf16, #tpu.memory_space<vmem>>, %arg2: memref<16x128xf32, #tpu.memory_space<vmem>>, %arg3: memref<640x512xbf16, #tpu.memory_space<vmem>>, %arg4: memref<1x512xf32, #tpu.memory_space<vmem>>, %arg5: memref<512x256xbf16, #tpu.memory_space<vmem>>, %arg6: memref<1x256xf32, #tpu.memory_space<vmem>>, %arg7: memref<16x128xf32, #tpu.memory_space<vmem>>, %arg8: memref<16x512xf32, #tpu.memory_space<vmem>>) attributes {dimension_semantics = [#tpu.dimension_semantics<arbitrary>], iteration_bounds = array<i64: 5>, scalar_prefetch = 0 : i64, scratch_operands = 1 : i64, tpu.core_type = #tpu.core_type<tc>, window_params = [{transform_indices = @transform_0, window_bounds = array<i64: 16, 640>}, {pipeline_mode = #tpu.pipeline_mode<synchronous>, transform_indices = @transform_1, window_bounds = array<i64: 16, 128>}, {transform_indices = @transform_2, window_bounds = array<i64: 640, 512>}, {pipeline_mode = #tpu.pipeline_mode<synchronous>, transform_indices = @transform_3, window_bounds = array<i64: 1, 512>}, {pipeline_mode = #tpu.pipeline_mode<synchronous>, transform_indices = @transform_4, window_bounds = array<i64: 512, 256>}, {pipeline_mode = #tpu.pipeline_mode<synchronous>, transform_indices = @transform_5, window_bounds = array<i64: 1, 256>}, {pipeline_mode = #tpu.pipeline_mode<synchronous>, transform_indices = @transform_6, window_bounds = array<i64: 16, 128>}]} {
    %c0_i32 = arith.constant 0 : i32
    %0 = arith.cmpi eq, %arg0, %c0_i32 : i32
    %1 = arith.extui %0 : i1 to i32
    %c0_i32_0 = arith.constant 0 : i32
    %2 = arith.cmpi ne, %1, %c0_i32_0 : i32
    scf.if %2 {
      %cst_9 = arith.constant 0.000000e+00 : f32
      %12 = vector.broadcast %cst_9 : f32 to vector<16x512xf32>
      %c0_10 = arith.constant 0 : index
      %c0_11 = arith.constant 0 : index
      %13 = vector.load %arg8[%c0_10, %c0_11] : memref<16x512xf32, #tpu.memory_space<vmem>>, vector<16x512xf32>
      tpu.vector_store %arg8[%c0_10, %c0_11], %12 {strides = array<i32>} : memref<16x512xf32, #tpu.memory_space<vmem>>, vector<16x512xf32>,
    } else {
    }
    %c0 = arith.constant 0 : index
    %c0_1 = arith.constant 0 : index
    %3 = vector.load %arg8[%c0, %c0_1] : memref<16x512xf32, #tpu.memory_space<vmem>>, vector<16x512xf32>
    %c0_2 = arith.constant 0 : index
    %c0_3 = arith.constant 0 : index
    %4 = vector.load %arg1[%c0_2, %c0_3] : memref<16x640xbf16, #tpu.memory_space<vmem>>, vector<16x640xbf16>
    %c0_4 = arith.constant 0 : index
    %c0_5 = arith.constant 0 : index
    %5 = vector.load %arg3[%c0_4, %c0_5] : memref<640x512xbf16, #tpu.memory_space<vmem>>, vector<640x512xbf16>
    %cst = arith.constant dense<0.000000e+00> : vector<16x512xf32>
    %6 = tpu.matmul %4, %5, %cst {dimension_numbers = #tpu.dot_dimension_numbers<[1], [0], [0], [1], [0, 0, 1, 1], [], []>} : vector<16x640xbf16>, vector<640x512xbf16>, vector<16x512xf32> -> vector<16x512xf32>
    %7 = arith.addf %3, %6 : vector<16x512xf32>
    %c0_6 = arith.constant 0 : index
    %c0_7 = arith.constant 0 : index
    %8 = vector.load %arg8[%c0_6, %c0_7] : memref<16x512xf32, #tpu.memory_space<vmem>>, vector<16x512xf32>
    tpu.vector_store %arg8[%c0_6, %c0_7], %7 {strides = array<i32>} : memref<16x512xf32, #tpu.memory_space<vmem>>, vector<16x512xf32>,
    %c4_i32 = arith.constant 4 : i32
    %9 = arith.cmpi eq, %arg0, %c4_i32 : i32
    %10 = arith.extui %9 : i1 to i32
    %c0_i32_8 = arith.constant 0 : i32
    %11 = arith.cmpi ne, %10, %c0_i32_8 : i32
    scf.if %11 {
      %c0_9 = arith.constant 0 : index
      %c0_10 = arith.constant 0 : index
      %12 = vector.load %arg8[%c0_9, %c0_10] : memref<16x512xf32, #tpu.memory_space<vmem>>, vector<16x512xf32>
      %c0_11 = arith.constant 0 : index
      %c0_12 = arith.constant 0 : index
      %13 = vector.load %arg4[%c0_11, %c0_12] : memref<1x512xf32, #tpu.memory_space<vmem>>, vector<1x512xf32>
      %14 = vector.broadcast %13 : vector<1x512xf32> to vector<16x512xf32>
      %15 = arith.addf %12, %14 : vector<16x512xf32>
      %cst_13 = arith.constant 0.000000e+00 : f32
      %16 = vector.broadcast %cst_13 : f32 to vector<16x512xf32>
      %17 = arith.maximumf %15, %16 : vector<16x512xf32>
      %18 = arith.truncf %17 : vector<16x512xf32> to vector<16x512xbf16>
      %c0_14 = arith.constant 0 : index
      %c0_15 = arith.constant 0 : index
      %19 = vector.load %arg5[%c0_14, %c0_15] : memref<512x256xbf16, #tpu.memory_space<vmem>>, vector<512x256xbf16>
      %cst_16 = arith.constant dense<0.000000e+00> : vector<16x256xf32>
      %20 = tpu.matmul %18, %19, %cst_16 {dimension_numbers = #tpu.dot_dimension_numbers<[1], [0], [0], [1], [0, 0, 1, 1], [], []>} : vector<16x512xbf16>, vector<512x256xbf16>, vector<16x256xf32> -> vector<16x256xf32>
      %c0_17 = arith.constant 0 : index
      %c0_18 = arith.constant 0 : index
      %21 = vector.load %arg6[%c0_17, %c0_18] : memref<1x256xf32, #tpu.memory_space<vmem>>, vector<1x256xf32>
      %22 = vector.broadcast %21 : vector<1x256xf32> to vector<16x256xf32>
      %23 = arith.addf %20, %22 : vector<16x256xf32>
      %24 = vector.extract_strided_slice %23 {offsets = [0, 0], sizes = [16, 128], strides = [1, 1]} : vector<16x256xf32> to vector<16x128xf32>
      %25 = vector.extract_strided_slice %23 {offsets = [0, 128], sizes = [16, 128], strides = [1, 1]} : vector<16x256xf32> to vector<16x128xf32>
      %c0_19 = arith.constant 0 : index
      %c0_20 = arith.constant 0 : index
      %26 = vector.load %arg2[%c0_19, %c0_20] : memref<16x128xf32, #tpu.memory_space<vmem>>, vector<16x128xf32>
      %27 = arith.mulf %24, %26 : vector<16x128xf32>
      %28 = arith.addf %27, %25 : vector<16x128xf32>
      %c0_21 = arith.constant 0 : index
      %c0_22 = arith.constant 0 : index
      %29 = vector.load %arg7[%c0_21, %c0_22] : memref<16x128xf32, #tpu.memory_space<vmem>>, vector<16x128xf32>
      tpu.vector_store %arg7[%c0_21, %c0_22], %28 {strides = array<i32>} : memref<16x128xf32, #tpu.memory_space<vmem>>, vector<16x128xf32>,
    } else {
    }
    return
  }
  func.func @transform_0(%arg0: i32) -> (i32, i32) {
    %c0_i32 = arith.constant 0 : i32
    %c0_i32_0 = arith.constant 0 : i32
    return %c0_i32, %arg0 : i32, i32
  }
  func.func @transform_1(%arg0: i32) -> (i32, i32) {
    %c0_i32 = arith.constant 0 : i32
    %c0_i32_0 = arith.constant 0 : i32
    %c0_i32_1 = arith.constant 0 : i32
    return %c0_i32, %c0_i32_0 : i32, i32
  }
  func.func @transform_2(%arg0: i32) -> (i32, i32) {
    %c0_i32 = arith.constant 0 : i32
    %c0_i32_0 = arith.constant 0 : i32
    return %arg0, %c0_i32 : i32, i32
  }
  func.func @transform_3(%arg0: i32) -> (i32, i32) {
    %c0_i32 = arith.constant 0 : i32
    %c0_i32_0 = arith.constant 0 : i32
    %c0_i32_1 = arith.constant 0 : i32
    return %c0_i32, %c0_i32_0 : i32, i32
  }
  func.func @transform_4(%arg0: i32) -> (i32, i32) {
    %c0_i32 = arith.constant 0 : i32
    %c0_i32_0 = arith.constant 0 : i32
    %c0_i32_1 = arith.constant 0 : i32
    return %c0_i32, %c0_i32_0 : i32, i32
  }
  func.func @transform_5(%arg0: i32) -> (i32, i32) {
    %c0_i32 = arith.constant 0 : i32
    %c0_i32_0 = arith.constant 0 : i32
    %c0_i32_1 = arith.constant 0 : i32
    return %c0_i32, %c0_i32_0 : i32, i32
  }
  func.func @transform_6(%arg0: i32) -> (i32, i32) {
    %c0_i32 = arith.constant 0 : i32
    %c0_i32_0 = arith.constant 0 : i32
    %c0_i32_1 = arith.constant 0 : i32
    return %c0_i32, %c0_i32_0 : i32, i32
  }
}

</mosaic_0001>

<llo_original>
// kernel: tla_forward.1
$region0: #{tla_forward.1}
  #allocation0 [shape = 'u32[]', space=smem, size = 0x4, offset = 0x4, fixed_abs, tag = 'smem constant byte address 0x4 - core index']
  #allocation1 [shape = 'u32[72,128]{1,0:T(1,128)}', space=vmem, size = 0x9000, scoped, tag = 'internal scratch']
  #allocation2 [shape = 'f32[16,512]{1,0:T(8,128)}', space=vmem, size = 0x8000, scoped, tag = 'scratch operand']
  %s0 = inlined_call_operand.vmem [shape: bf16[16,3200], index: 0, kind: input, shape index: {}]
  %s1 = inlined_call_operand.vmem [shape: f32[16,128], index: 1, kind: input, shape index: {}]
  %s2 = inlined_call_operand.vmem [shape: bf16[3200,512], index: 2, kind: input, shape index: {}]
  %s3 = inlined_call_operand.vmem [shape: f32[1,512], index: 3, kind: input, shape index: {}]
  %s4 = inlined_call_operand.vmem [shape: bf16[512,256], index: 4, kind: input, shape index: {}]
  %s5 = inlined_call_operand.vmem [shape: f32[1,256], index: 5, kind: input, shape index: {}]
  %s6 = inlined_call_operand.vmem [shape: f32[16,128], index: 6, kind: output, shape index: {}]
  %s7 = sld [smem:[#allocation0]]
  $region91: #{tla_forward.1} parent=0
    _
  %s9 = ssub.s32 1, %s7
  %s10 = scalar_select 0, %s9, %s7
  $region1: #{tla_forward.1} parent=0
    #allocation3 [shape = 'u8[40960]{0}', space=vmem, size = 0xa000, scoped, tag = 'input window, operand 0']
    loop: start=0, step=1, limit=7
    $region2: #{tla_forward.1} parent=1 // loop_pre_header
      _
    $region3: #{tla_forward.1} parent=1 // loop_header
      %s12 = sphi 0, %s16
      %p13 = scmp.ge.s32.totalorder %s12, 7
      %s22 = sphi 0, %s24
      %s25 = sphi 0, %s22
      %s26 = sphi 0, %s25
      %s42 = sphi 0, %s26
      %s46 = sphi 0, %s46
      %s48 = sphi 0, %s46
      %s49 = sphi 0, %s48
      %s63 = sphi 0, %s49
      %s69 = sphi 0, %s71
      %s72 = sphi 0, %s69
      %s73 = sphi 0, %s72
      %s89 = sphi 0, %s73
      %s93 = sphi 0, %s93
      %s95 = sphi 0, %s93
      %s96 = sphi 0, %s95
      %s110 = sphi 0, %s96
      %s114 = sphi 0, %s114
      %s116 = sphi 0, %s114
      %s117 = sphi 0, %s116
      %s131 = sphi 0, %s117
      %s135 = sphi 0, %s135
      %s137 = sphi 0, %s135
      %s138 = sphi 0, %s137
      %s152 = sphi 0, %s138
      %s156 = sphi 0, %s156
      %s158 = sphi 0, %s156
      %s159 = sphi 0, %s158
      %s173 = sphi 0, %s159
    $region4: #{tla_forward.1} parent=1 // loop_header_branch
      %15 = sbr.rel (%p13) target = $region8
    $region5: #{tla_forward.1} parent=1 // loop_body
      %s17 = ssub.s32 %s12, 1
      %s18 = ssub.s32 %s12, 2
      %s19 = sadd.s32 %s12, 1
      %s20 = ssub.s32 %s12, %s19
      %p21 = scmp.eq.s32.totalorder %s20, 0
      %s23 = sadd.s32 %s22, 1
      %s24 = scalar_select %p21, %s22, %s23
      %p27 = pneg %p21
      %p28 = scmp.eq.s32.totalorder %s12, 4
      %p29 = por %p27, %p28
      %p30 = scmp.ne.s32.totalorder %s22, %s25
      %p31 = scmp.eq.s32.totalorder %s12, 0
      %p32 = por %p30, %p31
      %p33 = scmp.ne.s32.totalorder %s22, %s25
      %p34 = scmp.eq.s32.totalorder %s17, 4
      %p35 = por %p33, %p34
      %p36 = scmp.ne.s32.totalorder %s25, %s26
      %p37 = scmp.eq.s32.totalorder %s17, 0
      %p38 = por %p36, %p37
      %p39 = scmp.ne.s32.totalorder %s25, %s26
      %p40 = scmp.eq.s32.totalorder %s18, 4
      %p41 = por %p39, %p40
      %p43 = scmp.ne.s32.totalorder %s26, %s42
      %p44 = scmp.eq.s32.totalorder %s18, 0
      %p45 = por %p43, %p44
      %s47 = sadd.s32 %s46, 1
      %p50 = scmp.eq.s32.totalorder %s12, 4
      %p51 = scmp.ne.s32.totalorder %s46, %s48
      %p52 = scmp.eq.s32.totalorder %s12, 0
      %p53 = por %p51, %p52
      %p54 = scmp.ne.s32.totalorder %s46, %s48
      %p55 = scmp.eq.s32.totalorder %s17, 4
      %p56 = por %p54, %p55
      %p57 = scmp.ne.s32.totalorder %s48, %s49
      %p58 = scmp.eq.s32.totalorder %s17, 0
      %p59 = por %p57, %p58
      %p60 = scmp.ne.s32.totalorder %s48, %s49
      %p61 = scmp.eq.s32.totalorder %s18, 4
      %p62 = por %p60, %p61
      %p64 = scmp.ne.s32.totalorder %s49, %s63
      %p65 = scmp.eq.s32.totalorder %s18, 0
      %p66 = por %p64, %p65
      %s67 = ssub.s32 %s12, %s19
      %p68 = scmp.eq.s32.totalorder %s67, 0
      %s70 = sadd.s32 %s69, 1
      %s71 = scalar_select %p68, %s69, %s70
      %p74 = pneg %p68
      %p75 = scmp.eq.s32.totalorder %s12, 4
      %p76 = por %p74, %p75
      %p77 = scmp.ne.s32.totalorder %s69, %s72
      %p78 = scmp.eq.s32.totalorder %s12, 0
      %p79 = por %p77, %p78
      %p80 = scmp.ne.s32.totalorder %s69, %s72
      %p81 = scmp.eq.s32.totalorder %s17, 4
      %p82 = por %p80, %p81
      %p83 = scmp.ne.s32.totalorder %s72, %s73
      %p84 = scmp.eq.s32.totalorder %s17, 0
      %p85 = por %p83, %p84
      %p86 = scmp.ne.s32.totalorder %s72, %s73
      %p87 = scmp.eq.s32.totalorder %s18, 4
      %p88 = por %p86, %p87
      %p90 = scmp.ne.s32.totalorder %s73, %s89
      %p91 = scmp.eq.s32.totalorder %s18, 0
      %p92 = por %p90, %p91
      %s94 = sadd.s32 %s93, 1
      %p97 = scmp.eq.s32.totalorder %s12, 4
      %p98 = scmp.ne.s32.totalorder %s93, %s95
      %p99 = scmp.eq.s32.totalorder %s12, 0
      %p100 = por %p98, %p99
      %p101 = scmp.ne.s32.totalorder %s93, %s95
      %p102 = scmp.eq.s32.totalorder %s17, 4
      %p103 = por %p101, %p102
      %p104 = scmp.ne.s32.totalorder %s95, %s96
      %p105 = scmp.eq.s32.totalorder %s17, 0
      %p106 = por %p104, %p105
      %p107 = scmp.ne.s32.totalorder %s95, %s96
      %p108 = scmp.eq.s32.totalorder %s18, 4
      %p109 = por %p107, %p108
      %p111 = scmp.ne.s32.totalorder %s96, %s110
      %p112 = scmp.eq.s32.totalorder %s18, 0
      %p113 = por %p111, %p112
      %s115 = sadd.s32 %s114, 1
      %p118 = scmp.eq.s32.totalorder %s12, 4
      %p119 = scmp.ne.s32.totalorder %s114, %s116
      %p120 = scmp.eq.s32.totalorder %s12, 0
      %p121 = por %p119, %p120
      %p122 = scmp.ne.s32.totalorder %s114, %s116
      %p123 = scmp.eq.s32.totalorder %s17, 4
      %p124 = por %p122, %p123
      %p125 = scmp.ne.s32.totalorder %s116, %s117
      %p126 = scmp.eq.s32.totalorder %s17, 0
      %p127 = por %p125, %p126
      %p128 = scmp.ne.s32.totalorder %s116, %s117
      %p129 = scmp.eq.s32.totalorder %s18, 4
      %p130 = por %p128, %p129
      %p132 = scmp.ne.s32.totalorder %s117, %s131
      %p133 = scmp.eq.s32.totalorder %s18, 0
      %p134 = por %p132, %p133
      %s136 = sadd.s32 %s135, 1
      %p139 = scmp.eq.s32.totalorder %s12, 4
      %p140 = scmp.ne.s32.totalorder %s135, %s137
      %p141 = scmp.eq.s32.totalorder %s12, 0
      %p142 = por %p140, %p141
      %p143 = scmp.ne.s32.totalorder %s135, %s137
      %p144 = scmp.eq.s32.totalorder %s17, 4
      %p145 = por %p143, %p144
      %p146 = scmp.ne.s32.totalorder %s137, %s138
      %p147 = scmp.eq.s32.totalorder %s17, 0
      %p148 = por %p146, %p147
      %p149 = scmp.ne.s32.totalorder %s137, %s138
      %p150 = scmp.eq.s32.totalorder %s18, 4
      %p151 = por %p149, %p150
      %p153 = scmp.ne.s32.totalorder %s138, %s152
      %p154 = scmp.eq.s32.totalorder %s18, 0
      %p155 = por %p153, %p154
      %s157 = sadd.s32 %s156, 1
      %p160 = scmp.eq.s32.totalorder %s12, 4
      %p161 = scmp.ne.s32.totalorder %s156, %s158
      %p162 = scmp.eq.s32.totalorder %s12, 0
      %p163 = por %p161, %p162
      %p164 = scmp.ne.s32.totalorder %s156, %s158
      %p165 = scmp.eq.s32.totalorder %s17, 4
      %p166 = por %p164, %p165
      %p167 = scmp.ne.s32.totalorder %s158, %s159
      %p168 = scmp.eq.s32.totalorder %s17, 0
      %p169 = por %p167, %p168
      %p170 = scmp.ne.s32.totalorder %s158, %s159
      %p171 = scmp.eq.s32.totalorder %s18, 4
      %p172 = por %p170, %p171
      %p174 = scmp.ne.s32.totalorder %s159, %s173
      %p175 = scmp.eq.s32.totalorder %s18, 0
      %p176 = por %p174, %p175
      %p177 = scmp.le.s32.totalorder 1, %s12
      %p178 = scmp.lt.s32.totalorder %s12, 6
      %p179 = pnand %p177, %p178
      %p180 = pneg %p179
      // Predicated region
      $region9: #{tla_forward.1} parent=5 // pred_check
        _
      $region10: #{tla_forward.1} parent=5 // pred_check_branch
        %182 = sbr.rel (%p179) target = $region12
      $region11: #{tla_forward.1} parent=5 // pred_region
        %s183 = ssub.s32 %s12, 1
        // Predicated region
        $region13: #{tla_forward.1} parent=11 // pred_check
          %p184 = pneg %p59
        $region14: #{tla_forward.1} parent=11 // pred_check_branch
          %186 = sbr.rel (%p184) target = $region16
        $region15: #{tla_forward.1} parent=11 // pred_region
          _
        $region16: #{tla_forward.1} parent=11 // pred_fallthru
          _
        // Predicated region
        $region17: #{tla_forward.1} parent=11 // pred_check
          %p187 = pneg %p106
        $region18: #{tla_forward.1} parent=11 // pred_check_branch
          %189 = sbr.rel (%p187) target = $region20
        $region19: #{tla_forward.1} parent=11 // pred_region
          _
        $region20: #{tla_forward.1} parent=11 // pred_fallthru
          _
        // Predicated region
        $region21: #{tla_forward.1} parent=11 // pred_check
          %p190 = pneg %p127
        $region22: #{tla_forward.1} parent=11 // pred_check_branch
          %192 = sbr.rel (%p190) target = $region24
        $region23: #{tla_forward.1} parent=11 // pred_region
          _
        $region24: #{tla_forward.1} parent=11 // pred_fallthru
          _
        // Predicated region
        $region25: #{tla_forward.1} parent=11 // pred_check
          %p193 = pneg %p148
        $region26: #{tla_forward.1} parent=11 // pred_check_branch
          %195 = sbr.rel (%p193) target = $region28
        $region27: #{tla_forward.1} parent=11 // pred_region
          _
        $region28: #{tla_forward.1} parent=11 // pred_fallthru
          _
      $region12: #{tla_forward.1} parent=5 // pred_fallthru
        _
      %p196 = scmp.lt.s32.totalorder %s12, 5
      // Predicated region
      $region29: #{tla_forward.1} parent=5 // pred_check
        %p197 = pneg %p196
      $region30: #{tla_forward.1} parent=5 // pred_check_branch
        %199 = sbr.rel (%p197) target = $region32
      $region31: #{tla_forward.1} parent=5 // pred_region
        // Predicated region
        $region33: #{tla_forward.1} parent=31 // pred_check
          %p200 = pneg %p32
        $region34: #{tla_forward.1} parent=31 // pred_check_branch
          %202 = sbr.rel (%p200) target = $region36
        $region35: #{tla_forward.1} parent=31 // pred_region
          %s203 = sand.u32 %s22, 1
          %s204 = sand.u32 %s22, 1
          %s205 = smul.addr %s204, 40
          %s206 = scalar_lea.vmem [#allocation3], %s205
          %s207 = smul.u32 5, %s12
          %s208 = smul.addr %s207, 4
          %s209 = scalar_lea.vmem %s0, %s208
          // Predicated region
          $region37: #{tla_forward.1} parent=35 // pred_check
            _
          $region38: #{tla_forward.1} parent=35 // pred_check_branch
            %211 = sbr.rel (0) target = $region40
          $region39: #{tla_forward.1} parent=35 // pred_region
            // Predicated region
            $region41: #{tla_forward.1} parent=39 // pred_check
              _
            $region42: #{tla_forward.1} parent=39 // pred_check_branch
              %213 = sbr.rel (0) target = $region44
            $region43: #{tla_forward.1} parent=39 // pred_region
              %s214 = scalar_lea.vmem %s209, 16
              %s215 = scalar_lea.vmem %s206, 16 [#allocation3]
              loop: start=0, step=1, limit=1
              $region45: #{tla_forward.1} parent=43 // loop_pre_header
                _
              $region46: #{tla_forward.1} parent=43 // loop_header
                %s217 = sphi 0, %s221
                %p218 = scmp.ge.s32.totalorder %s217, 1
                %s222 = sphi %s209, %s209
                %s223 = sphi %s206, %s206
              $region47: #{tla_forward.1} parent=43 // loop_header_branch
                %220 = sbr.rel (%p218) target = $region51
              $region48: #{tla_forward.1} parent=43 // loop_body
                %v224 = vld [vmem:[%s222] sm:$0xff]
                %225 = vst [vmem:[%s223] sm:$0xff] %v224
                %v226 = vld [vmem:[%s222 + $0x8] sm:$0xff]
                %227 = vst [vmem:[%s223 + $0x8] sm:$0xff] %v226
                %v228 = vld [vmem:[%s222 + $0x64] sm:$0xff]
                %229 = vst [vmem:[%s223 + $0x14] sm:$0xff] %v228
                %v230 = vld [vmem:[%s222 + $0x6c] sm:$0xff]
                %231 = vst [vmem:[%s223 + $0x1c] sm:$0xff] %v230
              $region49: #{tla_forward.1} parent=43 // loop_footer
                %s221 = sadd.s32 1, %s217
              $region50: #{tla_forward.1} parent=43 // loop_footer_branch
                %216 = sbr.rel target = $region46
              $region51: #{tla_forward.1} parent=43 // loop_exit
                _
              %s233 = ssub.s32 16, 1
              loop: start=0, step=1, limit=1
              $region52: #{tla_forward.1} parent=43 // loop_pre_header
                _
              $region53: #{tla_forward.1} parent=43 // loop_header
                %s235 = sphi 0, %s239
                %p236 = scmp.ge.s32.totalorder %s235, 1
                %s240 = sphi %s214, %s214
                %s241 = sphi %s215, %s215
              $region54: #{tla_forward.1} parent=43 // loop_header_branch
                %238 = sbr.rel (%p236) target = $region58
              $region55: #{tla_forward.1} parent=43 // loop_body
                %v242 = vld [vmem:[%s240] sm:%s233]
                %243 = vst [vmem:[%s241] sm:%s233] %v242
                %v244 = vld [vmem:[%s240 + $0x64] sm:%s233]
                %245 = vst [vmem:[%s241 + $0x14] sm:%s233] %v244
              $region56: #{tla_forward.1} parent=43 // loop_footer
                %s239 = sadd.s32 1, %s235
              $region57: #{tla_forward.1} parent=43 // loop_footer_branch
                %234 = sbr.rel target = $region53
              $region58: #{tla_forward.1} parent=43 // loop_exit
                _
            $region44: #{tla_forward.1} parent=39 // pred_fallthru
              _
          $region40: #{tla_forward.1} parent=35 // pred_fallthru
            _
          %246 = vnop
        $region36: #{tla_forward.1} parent=31 // pred_fallthru
          _
        // Predicated region
        $region59: #{tla_forward.1} parent=31 // pred_check
          %p247 = pneg %p79
        $region60: #{tla_forward.1} parent=31 // pred_check_branch
          %249 = sbr.rel (%p247) target = $region62
        $region61: #{tla_forward.1} parent=31 // pred_region
          %s250 = smul.u32 80, %s12
          %p251 = scmp.lt.s32.totalorder %s250, 399
          %s252 = scalar_select %p251, %s250, 399
          %s253 = smul.addr %s252, 4
          %s254 = smul.addr %s253, 4
          %s255 = scalar_lea.vmem %s2, %s254
          %s256 = smul.u32 80, %s12
        $region62: #{tla_forward.1} parent=31 // pred_fallthru
          _
      $region32: #{tla_forward.1} parent=5 // pred_fallthru
        _
      %p257 = scmp.le.s32.totalorder 1, %s12
      %p258 = scmp.lt.s32.totalorder %s12, 6
      %p259 = pnand %p257, %p258
      %p260 = pneg %p259
      // Predicated region
      $region63: #{tla_forward.1} parent=5 // pred_check
        _
      $region64: #{tla_forward.1} parent=5 // pred_check_branch
        %262 = sbr.rel (%p259) target = $region66
      $region65: #{tla_forward.1} parent=5 // pred_region
        %s263 = ssub.s32 %s12, 1
        %s264 = sand.u32 %s25, 1
        %s265 = sand.u32 %s25, 1
        %s266 = smul.addr %s265, 40
        %s267 = scalar_lea.vmem [#allocation3], %s266
        // Predicated region
        $region67: #{tla_forward.1} parent=65 // pred_check
          %p268 = pneg %p38
        $region68: #{tla_forward.1} parent=65 // pred_check_branch
          %270 = sbr.rel (%p268) target = $region70
        $region69: #{tla_forward.1} parent=65 // pred_region
          _
        $region70: #{tla_forward.1} parent=65 // pred_fallthru
          _
        %s271 = sand.u32 %s25, 1
        %s272 = sand.u32 %s25, 1
        %s273 = smul.addr %s272, 40
        %s274 = scalar_lea.vmem [#allocation3], %s273
        %p275 = pneg %p38
        %p276 = pneg %p35
        %p277 = pneg %p59
        %p278 = pneg %p56
        %s279 = smul.u32 80, %s17
        %p280 = scmp.lt.s32.totalorder %s279, 399
        %s281 = scalar_select %p280, %s279, 399
        %s282 = smul.addr %s281, 4
        %s283 = smul.addr %s282, 4
        %s284 = scalar_lea.vmem %s2, %s283
        %p285 = pneg %p85
        %p286 = pneg %p82
        %p287 = pneg %p106
        %p288 = pneg %p103
        %p289 = pneg %p127
        %p290 = pneg %p124
        %p291 = pneg %p148
        %p292 = pneg %p145
        %p293 = pneg %p169
        %p294 = pneg %p166
        %s295 = smul.u32 5, %s17
        %s296 = smul.u32 80, %s17
        %p297 = scmp.lt.s32.totalorder %s296, 399
        %s298 = scalar_select %p297, %s296, 399
        %s299 = smul.addr %s298, 4
        %s300 = smul.addr %s299, 4
        %s301 = scalar_lea.vmem %s2, %s300
        %s302 = smul.u32 80, %s17
        %p303 = scmp.eq.s32.totalorder %s17, 0
        // Predicated region
        $region71: #{tla_forward.1} parent=65 // pred_check
          %p304 = pneg %p303
        $region72: #{tla_forward.1} parent=65 // pred_check_branch
          %306 = sbr.rel (%p304) target = $region74
        $region73: #{tla_forward.1} parent=65 // pred_region
          %307 = vst [vmem:[#allocation2] sm:$0xff] 0.0
          %308 = vst [vmem:[#allocation2 + $0x8] sm:$0xff] 0.0
          %309 = vst [vmem:[#allocation2 + $0x10] sm:$0xff] 0.0
          %310 = vst [vmem:[#allocation2 + $0x18] sm:$0xff] 0.0
          %311 = vst [vmem:[#allocation2 + $0x20] sm:$0xff] 0.0
          %312 = vst [vmem:[#allocation2 + $0x28] sm:$0xff] 0.0
          %313 = vst [vmem:[#allocation2 + $0x30] sm:$0xff] 0.0
          %314 = vst [vmem:[#allocation2 + $0x38] sm:$0xff] 0.0
        $region74: #{tla_forward.1} parent=65 // pred_fallthru
          _
        %v315 = vld [vmem:[#allocation2] sm:$0xff]
        %v316 = vld [vmem:[#allocation2 + $0x8] sm:$0xff]
        %v317 = vld [vmem:[#allocation2 + $0x10] sm:$0xff]
        %v318 = vld [vmem:[#allocation2 + $0x18] sm:$0xff]
        %v319 = vld [vmem:[#allocation2 + $0x20] sm:$0xff]
        %v320 = vld [vmem:[#allocation2 + $0x28] sm:$0xff]
        %v321 = vld [vmem:[#allocation2 + $0x30] sm:$0xff]
        %v322 = vld [vmem:[#allocation2 + $0x38] sm:$0xff]
        %v323 = vld [vmem:[%s267] sm:$0xff]
        %v324 = vld [vmem:[%s267 + $0x8] sm:$0xff]
        %v325 = vld [vmem:[%s267 + $0x10] sm:$0xf]
        %v326 = vld [vmem:[%s267 + $0x14] sm:$0xff]
        %v327 = vld [vmem:[%s267 + $0x1c] sm:$0xff]
        %v328 = vld [vmem:[%s267 + $0x24] sm:$0xf]
        %v329 = vld [vmem:[%s301] sm:$0xff]
        %v330 = vld [vmem:[%s301 + $0x8] sm:$0xff]
        %v331 = vld [vmem:[%s301 + $0x10] sm:$0xff]
        %v332 = vld [vmem:[%s301 + $0x18] sm:$0xff]
        %v333 = vld [vmem:[%s301 + $0x20] sm:$0xff]
        %v334 = vld [vmem:[%s301 + $0x28] sm:$0xff]
        %v335 = vld [vmem:[%s301 + $0x30] sm:$0xff]
        %v336 = vld [vmem:[%s301 + $0x38] sm:$0xff]
        %v337 = vld [vmem:[%s301 + $0x40] sm:$0xff]
        %v338 = vld [vmem:[%s301 + $0x48] sm:$0xff]
        %v339 = vld [vmem:[%s301 + $0x50] sm:$0xff]
        %v340 = vld [vmem:[%s301 + $0x58] sm:$0xff]
        %v341 = vld [vmem:[%s301 + $0x60] sm:$0xff]
        %v342 = vld [vmem:[%s301 + $0x68] sm:$0xff]
        %v343 = vld [vmem:[%s301 + $0x70] sm:$0xff]
        %v344 = vld [vmem:[%s301 + $0x78] sm:$0xff]
        %v345 = vld [vmem:[%s301 + $0x80] sm:$0xff]
        %v346 = vld [vmem:[%s301 + $0x88] sm:$0xff]
        %v347 = vld [vmem:[%s301 + $0x90] sm:$0xff]
        %v348 = vld [vmem:[%s301 + $0x98] sm:$0xff]
        %v349 = vld [vmem:[%s301 + $0xa0] sm:$0xff]
        %v350 = vld [vmem:[%s301 + $0xa8] sm:$0xff]
        %v351 = vld [vmem:[%s301 + $0xb0] sm:$0xff]
        %v352 = vld [vmem:[%s301 + $0xb8] sm:$0xff]
        %v353 = vld [vmem:[%s301 + $0xc0] sm:$0xff]
        %v354 = vld [vmem:[%s301 + $0xc8] sm:$0xff]
        %v355 = vld [vmem:[%s301 + $0xd0] sm:$0xff]
        %v356 = vld [vmem:[%s301 + $0xd8] sm:$0xff]
        %v357 = vld [vmem:[%s301 + $0xe0] sm:$0xff]
        %v358 = vld [vmem:[%s301 + $0xe8] sm:$0xff]
        %v359 = vld [vmem:[%s301 + $0xf0] sm:$0xff]
        %v360 = vld [vmem:[%s301 + $0xf8] sm:$0xff]
        %v361 = vld [vmem:[%s301 + $0x100] sm:$0xff]
        %v362 = vld [vmem:[%s301 + $0x108] sm:$0xff]
        %v363 = vld [vmem:[%s301 + $0x110] sm:$0xff]
        %v364 = vld [vmem:[%s301 + $0x118] sm:$0xff]
        %v365 = vld [vmem:[%s301 + $0x120] sm:$0xff]
        %v366 = vld [vmem:[%s301 + $0x128] sm:$0xff]
        %v367 = vld [vmem:[%s301 + $0x130] sm:$0xff]
        %v368 = vld [vmem:[%s301 + $0x138] sm:$0xff]
        %v369 = vld [vmem:[%s301 + $0x140] sm:$0xff]
        %v370 = vld [vmem:[%s301 + $0x148] sm:$0xff]
        %v371 = vld [vmem:[%s301 + $0x150] sm:$0xff]
        %v372 = vld [vmem:[%s301 + $0x158] sm:$0xff]
        %v373 = vld [vmem:[%s301 + $0x160] sm:$0xff]
        %v374 = vld [vmem:[%s301 + $0x168] sm:$0xff]
        %v375 = vld [vmem:[%s301 + $0x170] sm:$0xff]
        %v376 = vld [vmem:[%s301 + $0x178] sm:$0xff]
        %v377 = vld [vmem:[%s301 + $0x180] sm:$0xff]
        %v378 = vld [vmem:[%s301 + $0x188] sm:$0xff]
        %v379 = vld [vmem:[%s301 + $0x190] sm:$0xff]
        %v380 = vld [vmem:[%s301 + $0x198] sm:$0xff]
        %v381 = vld [vmem:[%s301 + $0x1a0] sm:$0xff]
        %v382 = vld [vmem:[%s301 + $0x1a8] sm:$0xff]
        %v383 = vld [vmem:[%s301 + $0x1b0] sm:$0xff]
        %v384 = vld [vmem:[%s301 + $0x1b8] sm:$0xff]
        %v385 = vld [vmem:[%s301 + $0x1c0] sm:$0xff]
        %v386 = vld [vmem:[%s301 + $0x1c8] sm:$0xff]
        %v387 = vld [vmem:[%s301 + $0x1d0] sm:$0xff]
        %v388 = vld [vmem:[%s301 + $0x1d8] sm:$0xff]
        %v389 = vld [vmem:[%s301 + $0x1e0] sm:$0xff]
        %v390 = vld [vmem:[%s301 + $0x1e8] sm:$0xff]
        %v391 = vld [vmem:[%s301 + $0x1f0] sm:$0xff]
        %v392 = vld [vmem:[%s301 + $0x1f8] sm:$0xff]
        %v393 = vld [vmem:[%s301 + $0x200] sm:$0xff]
        %v394 = vld [vmem:[%s301 + $0x208] sm:$0xff]
        %v395 = vld [vmem:[%s301 + $0x210] sm:$0xff]
        %v396 = vld [vmem:[%s301 + $0x218] sm:$0xff]
        %v397 = vld [vmem:[%s301 + $0x220] sm:$0xff]
        %v398 = vld [vmem:[%s301 + $0x228] sm:$0xff]
        %v399 = vld [vmem:[%s301 + $0x230] sm:$0xff]
        %v400 = vld [vmem:[%s301 + $0x238] sm:$0xff]
        %v401 = vld [vmem:[%s301 + $0x240] sm:$0xff]
        %v402 = vld [vmem:[%s301 + $0x248] sm:$0xff]
        %v403 = vld [vmem:[%s301 + $0x250] sm:$0xff]
        %v404 = vld [vmem:[%s301 + $0x258] sm:$0xff]
        %v405 = vld [vmem:[%s301 + $0x260] sm:$0xff]
        %v406 = vld [vmem:[%s301 + $0x268] sm:$0xff]
        %v407 = vld [vmem:[%s301 + $0x270] sm:$0xff]
        %v408 = vld [vmem:[%s301 + $0x278] sm:$0xff]
        %v409 = vld [vmem:[%s301 + $0x280] sm:$0xff]
        %v410 = vld [vmem:[%s301 + $0x288] sm:$0xff]
        %v411 = vld [vmem:[%s301 + $0x290] sm:$0xff]
        %v412 = vld [vmem:[%s301 + $0x298] sm:$0xff]
        %v413 = vld [vmem:[%s301 + $0x2a0] sm:$0xff]
        %v414 = vld [vmem:[%s301 + $0x2a8] sm:$0xff]
        %v415 = vld [vmem:[%s301 + $0x2b0] sm:$0xff]
        %v416 = vld [vmem:[%s301 + $0x2b8] sm:$0xff]
        %v417 = vld [vmem:[%s301 + $0x2c0] sm:$0xff]
        %v418 = vld [vmem:[%s301 + $0x2c8] sm:$0xff]
        %v419 = vld [vmem:[%s301 + $0x2d0] sm:$0xff]
        %v420 = vld [vmem:[%s301 + $0x2d8] sm:$0xff]
        %v421 = vld [vmem:[%s301 + $0x2e0] sm:$0xff]
        %v422 = vld [vmem:[%s301 + $0x2e8] sm:$0xff]
        %v423 = vld [vmem:[%s301 + $0x2f0] sm:$0xff]
        %v424 = vld [vmem:[%s301 + $0x2f8] sm:$0xff]
        %v425 = vld [vmem:[%s301 + $0x300] sm:$0xff]
        %v426 = vld [vmem:[%s301 + $0x308] sm:$0xff]
        %v427 = vld [vmem:[%s301 + $0x310] sm:$0xff]
        %v428 = vld [vmem:[%s301 + $0x318] sm:$0xff]
        %v429 = vld [vmem:[%s301 + $0x320] sm:$0xff]
        %v430 = vld [vmem:[%s301 + $0x328] sm:$0xff]
        %v431 = vld [vmem:[%s301 + $0x330] sm:$0xff]
        %v432 = vld [vmem:[%s301 + $0x338] sm:$0xff]
        %v433 = vld [vmem:[%s301 + $0x340] sm:$0xff]
        %v434 = vld [vmem:[%s301 + $0x348] sm:$0xff]
        %v435 = vld [vmem:[%s301 + $0x350] sm:$0xff]
        %v436 = vld [vmem:[%s301 + $0x358] sm:$0xff]
        %v437 = vld [vmem:[%s301 + $0x360] sm:$0xff]
        %v438 = vld [vmem:[%s301 + $0x368] sm:$0xff]
        %v439 = vld [vmem:[%s301 + $0x370] sm:$0xff]
        %v440 = vld [vmem:[%s301 + $0x378] sm:$0xff]
        %v441 = vld [vmem:[%s301 + $0x380] sm:$0xff]
        %v442 = vld [vmem:[%s301 + $0x388] sm:$0xff]
        %v443 = vld [vmem:[%s301 + $0x390] sm:$0xff]
        %v444 = vld [vmem:[%s301 + $0x398] sm:$0xff]
        %v445 = vld [vmem:[%s301 + $0x3a0] sm:$0xff]
        %v446 = vld [vmem:[%s301 + $0x3a8] sm:$0xff]
        %v447 = vld [vmem:[%s301 + $0x3b0] sm:$0xff]
        %v448 = vld [vmem:[%s301 + $0x3b8] sm:$0xff]
        %v449 = vld [vmem:[%s301 + $0x3c0] sm:$0xff]
        %v450 = vld [vmem:[%s301 + $0x3c8] sm:$0xff]
        %v451 = vld [vmem:[%s301 + $0x3d0] sm:$0xff]
        %v452 = vld [vmem:[%s301 + $0x3d8] sm:$0xff]
        %v453 = vld [vmem:[%s301 + $0x3e0] sm:$0xff]
        %v454 = vld [vmem:[%s301 + $0x3e8] sm:$0xff]
        %v455 = vld [vmem:[%s301 + $0x3f0] sm:$0xff]
        %v456 = vld [vmem:[%s301 + $0x3f8] sm:$0xff]
        %v457 = vld [vmem:[%s301 + $0x400] sm:$0xff]
        %v458 = vld [vmem:[%s301 + $0x408] sm:$0xff]
        %v459 = vld [vmem:[%s301 + $0x410] sm:$0xff]
        %v460 = vld [vmem:[%s301 + $0x418] sm:$0xff]
        %v461 = vld [vmem:[%s301 + $0x420] sm:$0xff]
        %v462 = vld [vmem:[%s301 + $0x428] sm:$0xff]
        %v463 = vld [vmem:[%s301 + $0x430] sm:$0xff]
        %v464 = vld [vmem:[%s301 + $0x438] sm:$0xff]
        %v465 = vld [vmem:[%s301 + $0x440] sm:$0xff]
        %v466 = vld [vmem:[%s301 + $0x448] sm:$0xff]
        %v467 = vld [vmem:[%s301 + $0x450] sm:$0xff]
        %v468 = vld [vmem:[%s301 + $0x458] sm:$0xff]
        %v469 = vld [vmem:[%s301 + $0x460] sm:$0xff]
        %v470 = vld [vmem:[%s301 + $0x468] sm:$0xff]
        %v471 = vld [vmem:[%s301 + $0x470] sm:$0xff]
        %v472 = vld [vmem:[%s301 + $0x478] sm:$0xff]
        %v473 = vld [vmem:[%s301 + $0x480] sm:$0xff]
        %v474 = vld [vmem:[%s301 + $0x488] sm:$0xff]
        %v475 = vld [vmem:[%s301 + $0x490] sm:$0xff]
        %v476 = vld [vmem:[%s301 + $0x498] sm:$0xff]
        %v477 = vld [vmem:[%s301 + $0x4a0] sm:$0xff]
        %v478 = vld [vmem:[%s301 + $0x4a8] sm:$0xff]
        %v479 = vld [vmem:[%s301 + $0x4b0] sm:$0xff]
        %v480 = vld [vmem:[%s301 + $0x4b8] sm:$0xff]
        %v481 = vld [vmem:[%s301 + $0x4c0] sm:$0xff]
        %v482 = vld [vmem:[%s301 + $0x4c8] sm:$0xff]
        %v483 = vld [vmem:[%s301 + $0x4d0] sm:$0xff]
        %v484 = vld [vmem:[%s301 + $0x4d8] sm:$0xff]
        %v485 = vld [vmem:[%s301 + $0x4e0] sm:$0xff]
        %v486 = vld [vmem:[%s301 + $0x4e8] sm:$0xff]
        %v487 = vld [vmem:[%s301 + $0x4f0] sm:$0xff]
        %v488 = vld [vmem:[%s301 + $0x4f8] sm:$0xff]
        %v495 = vunpack.c.l.b16 %v323
        %v496 = vunpack.c.h.b16 %v323
        %v497 = vunpack.c.l.b16 %v324
        %v498 = vunpack.c.h.b16 %v324
        %v499 = vunpack.c.l.b16 %v325
        %v500 = vunpack.c.l.b16 %v326
        %v501 = vunpack.c.h.b16 %v326
        %v502 = vunpack.c.l.b16 %v327
        %v503 = vunpack.c.h.b16 %v327
        %v504 = vunpack.c.l.b16 %v328
        %v505 = vpack.c.b16 %v500, %v495
        %v506 = vpack.c.b16 %v501, %v496
        %v507 = vpack.c.b16 %v502, %v497
        %v508 = vpack.c.b16 %v503, %v498
        %v509 = vpack.c.b16 %v504, %v499
        %v675 = vunpack.c.l.b16 %v329
        %v676 = vunpack.c.h.b16 %v329
        %v677 = vunpack.c.l.b16 %v330
        %v678 = vunpack.c.h.b16 %v330
        %v679 = vunpack.c.l.b16 %v331
        %v680 = vunpack.c.h.b16 %v331
        %v681 = vunpack.c.l.b16 %v332
        %v682 = vunpack.c.h.b16 %v332
        %v683 = vunpack.c.l.b16 %v333
        %v684 = vunpack.c.h.b16 %v333
        %v685 = vunpack.c.l.b16 %v334
        %v686 = vunpack.c.h.b16 %v334
        %v687 = vunpack.c.l.b16 %v335
        %v688 = vunpack.c.h.b16 %v335
        %v689 = vunpack.c.l.b16 %v336
        %v690 = vunpack.c.h.b16 %v336
        %v691 = vunpack.c.l.b16 %v337
        %v692 = vunpack.c.h.b16 %v337
        %v693 = vunpack.c.l.b16 %v338
        %v694 = vunpack.c.h.b16 %v338
        %v695 = vunpack.c.l.b16 %v339
        %v696 = vunpack.c.h.b16 %v339
        %v697 = vunpack.c.l.b16 %v340
        %v698 = vunpack.c.h.b16 %v340
        %v699 = vunpack.c.l.b16 %v341
        %v700 = vunpack.c.h.b16 %v341
        %v701 = vunpack.c.l.b16 %v342
        %v702 = vunpack.c.h.b16 %v342
        %v703 = vunpack.c.l.b16 %v343
        %v704 = vunpack.c.h.b16 %v343
        %v705 = vunpack.c.l.b16 %v344
        %v706 = vunpack.c.h.b16 %v344
        %v707 = vunpack.c.l.b16 %v345
        %v708 = vunpack.c.h.b16 %v345
        %v709 = vunpack.c.l.b16 %v346
        %v710 = vunpack.c.h.b16 %v346
        %v711 = vunpack.c.l.b16 %v347
        %v712 = vunpack.c.h.b16 %v347
        %v713 = vunpack.c.l.b16 %v348
        %v714 = vunpack.c.h.b16 %v348
        %v715 = vunpack.c.l.b16 %v349
        %v716 = vunpack.c.h.b16 %v349
        %v717 = vunpack.c.l.b16 %v350
        %v718 = vunpack.c.h.b16 %v350
        %v719 = vunpack.c.l.b16 %v351
        %v720 = vunpack.c.h.b16 %v351
        %v721 = vunpack.c.l.b16 %v352
        %v722 = vunpack.c.h.b16 %v352
        %v723 = vunpack.c.l.b16 %v353
        %v724 = vunpack.c.h.b16 %v353
        %v725 = vunpack.c.l.b16 %v354
        %v726 = vunpack.c.h.b16 %v354
        %v727 = vunpack.c.l.b16 %v355
        %v728 = vunpack.c.h.b16 %v355
        %v729 = vunpack.c.l.b16 %v356
        %v730 = vunpack.c.h.b16 %v356
        %v731 = vunpack.c.l.b16 %v357
        %v732 = vunpack.c.h.b16 %v357
        %v733 = vunpack.c.l.b16 %v358
        %v734 = vunpack.c.h.b16 %v358
        %v735 = vunpack.c.l.b16 %v359
        %v736 = vunpack.c.h.b16 %v359
        %v737 = vunpack.c.l.b16 %v360
        %v738 = vunpack.c.h.b16 %v360
        %v739 = vunpack.c.l.b16 %v361
        %v740 = vunpack.c.h.b16 %v361
        %v741 = vunpack.c.l.b16 %v362
        %v742 = vunpack.c.h.b16 %v362
        %v743 = vunpack.c.l.b16 %v363
        %v744 = vunpack.c.h.b16 %v363
        %v745 = vunpack.c.l.b16 %v364
        %v746 = vunpack.c.h.b16 %v364
        %v747 = vunpack.c.l.b16 %v365
        %v748 = vunpack.c.h.b16 %v365
        %v749 = vunpack.c.l.b16 %v366
        %v750 = vunpack.c.h.b16 %v366
        %v751 = vunpack.c.l.b16 %v367
        %v752 = vunpack.c.h.b16 %v367
        %v753 = vunpack.c.l.b16 %v368
        %v754 = vunpack.c.h.b16 %v368
        %v755 = vunpack.c.l.b16 %v369
        %v756 = vunpack.c.h.b16 %v369
        %v757 = vunpack.c.l.b16 %v370
        %v758 = vunpack.c.h.b16 %v370
        %v759 = vunpack.c.l.b16 %v371
        %v760 = vunpack.c.h.b16 %v371
        %v761 = vunpack.c.l.b16 %v372
        %v762 = vunpack.c.h.b16 %v372
        %v763 = vunpack.c.l.b16 %v373
        %v764 = vunpack.c.h.b16 %v373
        %v765 = vunpack.c.l.b16 %v374
        %v766 = vunpack.c.h.b16 %v374
        %v767 = vunpack.c.l.b16 %v375
        %v768 = vunpack.c.h.b16 %v375
        %v769 = vunpack.c.l.b16 %v376
        %v770 = vunpack.c.h.b16 %v376
        %v771 = vunpack.c.l.b16 %v377
        %v772 = vunpack.c.h.b16 %v377
        %v773 = vunpack.c.l.b16 %v378
        %v774 = vunpack.c.h.b16 %v378
        %v775 = vunpack.c.l.b16 %v379
        %v776 = vunpack.c.h.b16 %v379
        %v777 = vunpack.c.l.b16 %v380
        %v778 = vunpack.c.h.b16 %v380
        %v779 = vunpack.c.l.b16 %v381
        %v780 = vunpack.c.h.b16 %v381
        %v781 = vunpack.c.l.b16 %v382
        %v782 = vunpack.c.h.b16 %v382
        %v783 = vunpack.c.l.b16 %v383
        %v784 = vunpack.c.h.b16 %v383
        %v785 = vunpack.c.l.b16 %v384
        %v786 = vunpack.c.h.b16 %v384
        %v787 = vunpack.c.l.b16 %v385
        %v788 = vunpack.c.h.b16 %v385
        %v789 = vunpack.c.l.b16 %v386
        %v790 = vunpack.c.h.b16 %v386
        %v791 = vunpack.c.l.b16 %v387
        %v792 = vunpack.c.h.b16 %v387
        %v793 = vunpack.c.l.b16 %v388
        %v794 = vunpack.c.h.b16 %v388
        %v795 = vunpack.c.l.b16 %v389
        %v796 = vunpack.c.h.b16 %v389
        %v797 = vunpack.c.l.b16 %v390
        %v798 = vunpack.c.h.b16 %v390
        %v799 = vunpack.c.l.b16 %v391
        %v800 = vunpack.c.h.b16 %v391
        %v801 = vunpack.c.l.b16 %v392
        %v802 = vunpack.c.h.b16 %v392
        %v803 = vunpack.c.l.b16 %v393
        %v804 = vunpack.c.h.b16 %v393
        %v805 = vunpack.c.l.b16 %v394
        %v806 = vunpack.c.h.b16 %v394
        %v807 = vunpack.c.l.b16 %v395
        %v808 = vunpack.c.h.b16 %v395
        %v809 = vunpack.c.l.b16 %v396
        %v810 = vunpack.c.h.b16 %v396
        %v811 = vunpack.c.l.b16 %v397
        %v812 = vunpack.c.h.b16 %v397
        %v813 = vunpack.c.l.b16 %v398
        %v814 = vunpack.c.h.b16 %v398
        %v815 = vunpack.c.l.b16 %v399
        %v816 = vunpack.c.h.b16 %v399
        %v817 = vunpack.c.l.b16 %v400
        %v818 = vunpack.c.h.b16 %v400
        %v819 = vunpack.c.l.b16 %v401
        %v820 = vunpack.c.h.b16 %v401
        %v821 = vunpack.c.l.b16 %v402
        %v822 = vunpack.c.h.b16 %v402
        %v823 = vunpack.c.l.b16 %v403
        %v824 = vunpack.c.h.b16 %v403
        %v825 = vunpack.c.l.b16 %v404
        %v826 = vunpack.c.h.b16 %v404
        %v827 = vunpack.c.l.b16 %v405
        %v828 = vunpack.c.h.b16 %v405
        %v829 = vunpack.c.l.b16 %v406
        %v830 = vunpack.c.h.b16 %v406
        %v831 = vunpack.c.l.b16 %v407
        %v832 = vunpack.c.h.b16 %v407
        %v833 = vunpack.c.l.b16 %v408
        %v834 = vunpack.c.h.b16 %v408
        %v835 = vunpack.c.l.b16 %v409
        %v836 = vunpack.c.h.b16 %v409
        %v837 = vunpack.c.l.b16 %v410
        %v838 = vunpack.c.h.b16 %v410
        %v839 = vunpack.c.l.b16 %v411
        %v840 = vunpack.c.h.b16 %v411
        %v841 = vunpack.c.l.b16 %v412
        %v842 = vunpack.c.h.b16 %v412
        %v843 = vunpack.c.l.b16 %v413
        %v844 = vunpack.c.h.b16 %v413
        %v845 = vunpack.c.l.b16 %v414
        %v846 = vunpack.c.h.b16 %v414
        %v847 = vunpack.c.l.b16 %v415
        %v848 = vunpack.c.h.b16 %v415
        %v849 = vunpack.c.l.b16 %v416
        %v850 = vunpack.c.h.b16 %v416
        %v851 = vunpack.c.l.b16 %v417
        %v852 = vunpack.c.h.b16 %v417
        %v853 = vunpack.c.l.b16 %v418
        %v854 = vunpack.c.h.b16 %v418
        %v855 = vunpack.c.l.b16 %v419
        %v856 = vunpack.c.h.b16 %v419
        %v857 = vunpack.c.l.b16 %v420
        %v858 = vunpack.c.h.b16 %v420
        %v859 = vunpack.c.l.b16 %v421
        %v860 = vunpack.c.h.b16 %v421
        %v861 = vunpack.c.l.b16 %v422
        %v862 = vunpack.c.h.b16 %v422
        %v863 = vunpack.c.l.b16 %v423
        %v864 = vunpack.c.h.b16 %v423
        %v865 = vunpack.c.l.b16 %v424
        %v866 = vunpack.c.h.b16 %v424
        %v867 = vunpack.c.l.b16 %v425
        %v868 = vunpack.c.h.b16 %v425
        %v869 = vunpack.c.l.b16 %v426
        %v870 = vunpack.c.h.b16 %v426
        %v871 = vunpack.c.l.b16 %v427
        %v872 = vunpack.c.h.b16 %v427
        %v873 = vunpack.c.l.b16 %v428
        %v874 = vunpack.c.h.b16 %v428
        %v875 = vunpack.c.l.b16 %v429
        %v876 = vunpack.c.h.b16 %v429
        %v877 = vunpack.c.l.b16 %v430
        %v878 = vunpack.c.h.b16 %v430
        %v879 = vunpack.c.l.b16 %v431
        %v880 = vunpack.c.h.b16 %v431
        %v881 = vunpack.c.l.b16 %v432
        %v882 = vunpack.c.h.b16 %v432
        %v883 = vunpack.c.l.b16 %v433
        %v884 = vunpack.c.h.b16 %v433
        %v885 = vunpack.c.l.b16 %v434
        %v886 = vunpack.c.h.b16 %v434
        %v887 = vunpack.c.l.b16 %v435
        %v888 = vunpack.c.h.b16 %v435
        %v889 = vunpack.c.l.b16 %v436
        %v890 = vunpack.c.h.b16 %v436
        %v891 = vunpack.c.l.b16 %v437
        %v892 = vunpack.c.h.b16 %v437
        %v893 = vunpack.c.l.b16 %v438
        %v894 = vunpack.c.h.b16 %v438
        %v895 = vunpack.c.l.b16 %v439
        %v896 = vunpack.c.h.b16 %v439
        %v897 = vunpack.c.l.b16 %v440
        %v898 = vunpack.c.h.b16 %v440
        %v899 = vunpack.c.l.b16 %v441
        %v900 = vunpack.c.h.b16 %v441
        %v901 = vunpack.c.l.b16 %v442
        %v902 = vunpack.c.h.b16 %v442
        %v903 = vunpack.c.l.b16 %v443
        %v904 = vunpack.c.h.b16 %v443
        %v905 = vunpack.c.l.b16 %v444
        %v906 = vunpack.c.h.b16 %v444
        %v907 = vunpack.c.l.b16 %v445
        %v908 = vunpack.c.h.b16 %v445
        %v909 = vunpack.c.l.b16 %v446
        %v910 = vunpack.c.h.b16 %v446
        %v911 = vunpack.c.l.b16 %v447
        %v912 = vunpack.c.h.b16 %v447
        %v913 = vunpack.c.l.b16 %v448
        %v914 = vunpack.c.h.b16 %v448
        %v915 = vunpack.c.l.b16 %v449
        %v916 = vunpack.c.h.b16 %v449
        %v917 = vunpack.c.l.b16 %v450
        %v918 = vunpack.c.h.b16 %v450
        %v919 = vunpack.c.l.b16 %v451
        %v920 = vunpack.c.h.b16 %v451
        %v921 = vunpack.c.l.b16 %v452
        %v922 = vunpack.c.h.b16 %v452
        %v923 = vunpack.c.l.b16 %v453
        %v924 = vunpack.c.h.b16 %v453
        %v925 = vunpack.c.l.b16 %v454
        %v926 = vunpack.c.h.b16 %v454
        %v927 = vunpack.c.l.b16 %v455
        %v928 = vunpack.c.h.b16 %v455
        %v929 = vunpack.c.l.b16 %v456
        %v930 = vunpack.c.h.b16 %v456
        %v931 = vunpack.c.l.b16 %v457
        %v932 = vunpack.c.h.b16 %v457
        %v933 = vunpack.c.l.b16 %v458
        %v934 = vunpack.c.h.b16 %v458
        %v935 = vunpack.c.l.b16 %v459
        %v936 = vunpack.c.h.b16 %v459
        %v937 = vunpack.c.l.b16 %v460
        %v938 = vunpack.c.h.b16 %v460
        %v939 = vunpack.c.l.b16 %v461
        %v940 = vunpack.c.h.b16 %v461
        %v941 = vunpack.c.l.b16 %v462
        %v942 = vunpack.c.h.b16 %v462
        %v943 = vunpack.c.l.b16 %v463
        %v944 = vunpack.c.h.b16 %v463
        %v945 = vunpack.c.l.b16 %v464
        %v946 = vunpack.c.h.b16 %v464
        %v947 = vunpack.c.l.b16 %v465
        %v948 = vunpack.c.h.b16 %v465
        %v949 = vunpack.c.l.b16 %v466
        %v950 = vunpack.c.h.b16 %v466
        %v951 = vunpack.c.l.b16 %v467
        %v952 = vunpack.c.h.b16 %v467
        %v953 = vunpack.c.l.b16 %v468
        %v954 = vunpack.c.h.b16 %v468
        %v955 = vunpack.c.l.b16 %v469
        %v956 = vunpack.c.h.b16 %v469
        %v957 = vunpack.c.l.b16 %v470
        %v958 = vunpack.c.h.b16 %v470
        %v959 = vunpack.c.l.b16 %v471
        %v960 = vunpack.c.h.b16 %v471
        %v961 = vunpack.c.l.b16 %v472
        %v962 = vunpack.c.h.b16 %v472
        %v963 = vunpack.c.l.b16 %v473
        %v964 = vunpack.c.h.b16 %v473
        %v965 = vunpack.c.l.b16 %v474
        %v966 = vunpack.c.h.b16 %v474
        %v967 = vunpack.c.l.b16 %v475
        %v968 = vunpack.c.h.b16 %v475
        %v969 = vunpack.c.l.b16 %v476
        %v970 = vunpack.c.h.b16 %v476
        %v971 = vunpack.c.l.b16 %v477
        %v972 = vunpack.c.h.b16 %v477
        %v973 = vunpack.c.l.b16 %v478
        %v974 = vunpack.c.h.b16 %v478
        %v975 = vunpack.c.l.b16 %v479
        %v976 = vunpack.c.h.b16 %v479
        %v977 = vunpack.c.l.b16 %v480
        %v978 = vunpack.c.h.b16 %v480
        %v979 = vunpack.c.l.b16 %v481
        %v980 = vunpack.c.h.b16 %v481
        %v981 = vunpack.c.l.b16 %v482
        %v982 = vunpack.c.h.b16 %v482
        %v983 = vunpack.c.l.b16 %v483
        %v984 = vunpack.c.h.b16 %v483
        %v985 = vunpack.c.l.b16 %v484
        %v986 = vunpack.c.h.b16 %v484
        %v987 = vunpack.c.l.b16 %v485
        %v988 = vunpack.c.h.b16 %v485
        %v989 = vunpack.c.l.b16 %v486
        %v990 = vunpack.c.h.b16 %v486
        %v991 = vunpack.c.l.b16 %v487
        %v992 = vunpack.c.h.b16 %v487
        %v993 = vunpack.c.l.b16 %v488
        %v994 = vunpack.c.h.b16 %v488
        %v995 = vpack.c.b16 %v679, %v675
        %v996 = vpack.c.b16 %v680, %v676
        %v997 = vpack.c.b16 %v681, %v677
        %v998 = vpack.c.b16 %v682, %v678
        %v999 = vpack.c.b16 %v687, %v683
        %v1000 = vpack.c.b16 %v688, %v684
        %v1001 = vpack.c.b16 %v689, %v685
        %v1002 = vpack.c.b16 %v690, %v686
        %v1003 = vpack.c.b16 %v695, %v691
        %v1004 = vpack.c.b16 %v696, %v692
        %v1005 = vpack.c.b16 %v697, %v693
        %v1006 = vpack.c.b16 %v698, %v694
        %v1007 = vpack.c.b16 %v703, %v699
        %v1008 = vpack.c.b16 %v704, %v700
        %v1009 = vpack.c.b16 %v705, %v701
        %v1010 = vpack.c.b16 %v706, %v702
        %v1011 = vpack.c.b16 %v711, %v707
        %v1012 = vpack.c.b16 %v712, %v708
        %v1013 = vpack.c.b16 %v713, %v709
        %v1014 = vpack.c.b16 %v714, %v710
        %v1015 = vpack.c.b16 %v719, %v715
        %v1016 = vpack.c.b16 %v720, %v716
        %v1017 = vpack.c.b16 %v721, %v717
        %v1018 = vpack.c.b16 %v722, %v718
        %v1019 = vpack.c.b16 %v727, %v723
        %v1020 = vpack.c.b16 %v728, %v724
        %v1021 = vpack.c.b16 %v729, %v725
        %v1022 = vpack.c.b16 %v730, %v726
        %v1023 = vpack.c.b16 %v735, %v731
        %v1024 = vpack.c.b16 %v736, %v732
        %v1025 = vpack.c.b16 %v737, %v733
        %v1026 = vpack.c.b16 %v738, %v734
        %v1027 = vpack.c.b16 %v743, %v739
        %v1028 = vpack.c.b16 %v744, %v740
        %v1029 = vpack.c.b16 %v745, %v741
        %v1030 = vpack.c.b16 %v746, %v742
        %v1031 = vpack.c.b16 %v751, %v747
        %v1032 = vpack.c.b16 %v752, %v748
        %v1033 = vpack.c.b16 %v753, %v749
        %v1034 = vpack.c.b16 %v754, %v750
        %v1035 = vpack.c.b16 %v759, %v755
        %v1036 = vpack.c.b16 %v760, %v756
        %v1037 = vpack.c.b16 %v761, %v757
        %v1038 = vpack.c.b16 %v762, %v758
        %v1039 = vpack.c.b16 %v767, %v763
        %v1040 = vpack.c.b16 %v768, %v764
        %v1041 = vpack.c.b16 %v769, %v765
        %v1042 = vpack.c.b16 %v770, %v766
        %v1043 = vpack.c.b16 %v775, %v771
        %v1044 = vpack.c.b16 %v776, %v772
        %v1045 = vpack.c.b16 %v777, %v773
        %v1046 = vpack.c.b16 %v778, %v774
        %v1047 = vpack.c.b16 %v783, %v779
        %v1048 = vpack.c.b16 %v784, %v780
        %v1049 = vpack.c.b16 %v785, %v781
        %v1050 = vpack.c.b16 %v786, %v782
        %v1051 = vpack.c.b16 %v791, %v787
        %v1052 = vpack.c.b16 %v792, %v788
        %v1053 = vpack.c.b16 %v793, %v789
        %v1054 = vpack.c.b16 %v794, %v790
        %v1055 = vpack.c.b16 %v799, %v795
        %v1056 = vpack.c.b16 %v800, %v796
        %v1057 = vpack.c.b16 %v801, %v797
        %v1058 = vpack.c.b16 %v802, %v798
        %v1059 = vpack.c.b16 %v807, %v803
        %v1060 = vpack.c.b16 %v808, %v804
        %v1061 = vpack.c.b16 %v809, %v805
        %v1062 = vpack.c.b16 %v810, %v806
        %v1063 = vpack.c.b16 %v815, %v811
        %v1064 = vpack.c.b16 %v816, %v812
        %v1065 = vpack.c.b16 %v817, %v813
        %v1066 = vpack.c.b16 %v818, %v814
        %v1067 = vpack.c.b16 %v823, %v819
        %v1068 = vpack.c.b16 %v824, %v820
        %v1069 = vpack.c.b16 %v825, %v821
        %v1070 = vpack.c.b16 %v826, %v822
        %v1071 = vpack.c.b16 %v831, %v827
        %v1072 = vpack.c.b16 %v832, %v828
        %v1073 = vpack.c.b16 %v833, %v829
        %v1074 = vpack.c.b16 %v834, %v830
        %v1075 = vpack.c.b16 %v839, %v835
        %v1076 = vpack.c.b16 %v840, %v836
        %v1077 = vpack.c.b16 %v841, %v837
        %v1078 = vpack.c.b16 %v842, %v838
        %v1079 = vpack.c.b16 %v847, %v843
        %v1080 = vpack.c.b16 %v848, %v844
        %v1081 = vpack.c.b16 %v849, %v845
        %v1082 = vpack.c.b16 %v850, %v846
        %v1083 = vpack.c.b16 %v855, %v851
        %v1084 = vpack.c.b16 %v856, %v852
        %v1085 = vpack.c.b16 %v857, %v853
        %v1086 = vpack.c.b16 %v858, %v854
        %v1087 = vpack.c.b16 %v863, %v859
        %v1088 = vpack.c.b16 %v864, %v860
        %v1089 = vpack.c.b16 %v865, %v861
        %v1090 = vpack.c.b16 %v866, %v862
        %v1091 = vpack.c.b16 %v871, %v867
        %v1092 = vpack.c.b16 %v872, %v868
        %v1093 = vpack.c.b16 %v873, %v869
        %v1094 = vpack.c.b16 %v874, %v870
        %v1095 = vpack.c.b16 %v879, %v875
        %v1096 = vpack.c.b16 %v880, %v876
        %v1097 = vpack.c.b16 %v881, %v877
        %v1098 = vpack.c.b16 %v882, %v878
        %v1099 = vpack.c.b16 %v887, %v883
        %v1100 = vpack.c.b16 %v888, %v884
        %v1101 = vpack.c.b16 %v889, %v885
        %v1102 = vpack.c.b16 %v890, %v886
        %v1103 = vpack.c.b16 %v895, %v891
        %v1104 = vpack.c.b16 %v896, %v892
        %v1105 = vpack.c.b16 %v897, %v893
        %v1106 = vpack.c.b16 %v898, %v894
        %v1107 = vpack.c.b16 %v903, %v899
        %v1108 = vpack.c.b16 %v904, %v900
        %v1109 = vpack.c.b16 %v905, %v901
        %v1110 = vpack.c.b16 %v906, %v902
        %v1111 = vpack.c.b16 %v911, %v907
        %v1112 = vpack.c.b16 %v912, %v908
        %v1113 = vpack.c.b16 %v913, %v909
        %v1114 = vpack.c.b16 %v914, %v910
        %v1115 = vpack.c.b16 %v919, %v915
        %v1116 = vpack.c.b16 %v920, %v916
        %v1117 = vpack.c.b16 %v921, %v917
        %v1118 = vpack.c.b16 %v922, %v918
        %v1119 = vpack.c.b16 %v927, %v923
        %v1120 = vpack.c.b16 %v928, %v924
        %v1121 = vpack.c.b16 %v929, %v925
        %v1122 = vpack.c.b16 %v930, %v926
        %v1123 = vpack.c.b16 %v935, %v931
        %v1124 = vpack.c.b16 %v936, %v932
        %v1125 = vpack.c.b16 %v937, %v933
        %v1126 = vpack.c.b16 %v938, %v934
        %v1127 = vpack.c.b16 %v943, %v939
        %v1128 = vpack.c.b16 %v944, %v940
        %v1129 = vpack.c.b16 %v945, %v941
        %v1130 = vpack.c.b16 %v946, %v942
        %v1131 = vpack.c.b16 %v951, %v947
        %v1132 = vpack.c.b16 %v952, %v948
        %v1133 = vpack.c.b16 %v953, %v949
        %v1134 = vpack.c.b16 %v954, %v950
        %v1135 = vpack.c.b16 %v959, %v955
        %v1136 = vpack.c.b16 %v960, %v956
        %v1137 = vpack.c.b16 %v961, %v957
        %v1138 = vpack.c.b16 %v962, %v958
        %v1139 = vpack.c.b16 %v967, %v963
        %v1140 = vpack.c.b16 %v968, %v964
        %v1141 = vpack.c.b16 %v969, %v965
        %v1142 = vpack.c.b16 %v970, %v966
        %v1143 = vpack.c.b16 %v975, %v971
        %v1144 = vpack.c.b16 %v976, %v972
        %v1145 = vpack.c.b16 %v977, %v973
        %v1146 = vpack.c.b16 %v978, %v974
        %v1147 = vpack.c.b16 %v983, %v979
        %v1148 = vpack.c.b16 %v984, %v980
        %v1149 = vpack.c.b16 %v985, %v981
        %v1150 = vpack.c.b16 %v986, %v982
        %v1151 = vpack.c.b16 %v991, %v987
        %v1152 = vpack.c.b16 %v992, %v988
        %v1153 = vpack.c.b16 %v993, %v989
        %v1154 = vpack.c.b16 %v994, %v990
        %1315 = vmatpush.bf16.msra.mxu0 %v1023
        %1316 = vmatpush.bf16.msra.mxu0 %v1019
        %1317 = vmatpush.bf16.msra.mxu0 %v1015
        %1318 = vmatpush.bf16.msra.mxu0 %v1011
        %1319 = vmatpush.bf16.msra.mxu0 %v1007
        %1320 = vmatpush.bf16.msra.mxu0 %v1003
        %1321 = vmatpush.bf16.msra.mxu0 %v999
        %1322 = vmatpush.bf16.msra.mxu0 %v995
        %1323 = vmatmul.bf16.gmra.mxu0 %v505
        %v1324 = vpop.f32.mrf.mxu0
        %v1325 = vadd.f32 0.0, %v1324
        %v1326 = vpop.f32.mrf.mxu0
        %v1327 = vadd.f32 0.0, %v1326
        %1328 = vdwg.mxu0
        %1329 = vmatpush.bf16.msra.mxu0 %v1055
        %1330 = vmatpush.bf16.msra.mxu0 %v1051
        %1331 = vmatpush.bf16.msra.mxu0 %v1047
        %1332 = vmatpush.bf16.msra.mxu0 %v1043
        %1333 = vmatpush.bf16.msra.mxu0 %v1039
        %1334 = vmatpush.bf16.msra.mxu0 %v1035
        %1335 = vmatpush.bf16.msra.mxu0 %v1031
        %1336 = vmatpush.bf16.msra.mxu0 %v1027
        %1337 = vmatmul.bf16.gmra.mxu0 %v506
        %v1338 = vpop.f32.mrf.mxu0
        %v1339 = vadd.f32 %v1325, %v1338
        %v1340 = vpop.f32.mrf.mxu0
        %v1341 = vadd.f32 %v1327, %v1340
        %1342 = vdwg.mxu0
        %1343 = vmatpush.bf16.msra.mxu0 %v1087
        %1344 = vmatpush.bf16.msra.mxu0 %v1083
        %1345 = vmatpush.bf16.msra.mxu0 %v1079
        %1346 = vmatpush.bf16.msra.mxu0 %v1075
        %1347 = vmatpush.bf16.msra.mxu0 %v1071
        %1348 = vmatpush.bf16.msra.mxu0 %v1067
        %1349 = vmatpush.bf16.msra.mxu0 %v1063
        %1350 = vmatpush.bf16.msra.mxu0 %v1059
        %1351 = vmatmul.bf16.gmra.mxu0 %v507
        %v1352 = vpop.f32.mrf.mxu0
        %v1353 = vadd.f32 %v1339, %v1352
        %v1354 = vpop.f32.mrf.mxu0
        %v1355 = vadd.f32 %v1341, %v1354
        %1356 = vdwg.mxu0
        %1357 = vmatpush.bf16.msra.mxu0 %v1119
        %1358 = vmatpush.bf16.msra.mxu0 %v1115
        %1359 = vmatpush.bf16.msra.mxu0 %v1111
        %1360 = vmatpush.bf16.msra.mxu0 %v1107
        %1361 = vmatpush.bf16.msra.mxu0 %v1103
        %1362 = vmatpush.bf16.msra.mxu0 %v1099
        %1363 = vmatpush.bf16.msra.mxu0 %v1095
        %1364 = vmatpush.bf16.msra.mxu0 %v1091
        %1365 = vmatmul.bf16.gmra.mxu0 %v508
        %v1366 = vpop.f32.mrf.mxu0
        %v1367 = vadd.f32 %v1353, %v1366
        %v1368 = vpop.f32.mrf.mxu0
        %v1369 = vadd.f32 %v1355, %v1368
        %1370 = vdwg.mxu0
        %1371 = vmatpush.bf16.msra.mxu0 %v1151
        %1372 = vmatpush.bf16.msra.mxu0 %v1147
        %1373 = vmatpush.bf16.msra.mxu0 %v1143
        %1374 = vmatpush.bf16.msra.mxu0 %v1139
        %1375 = vmatpush.bf16.msra.mxu0 %v1135
        %1376 = vmatpush.bf16.msra.mxu0 %v1131
        %1377 = vmatpush.bf16.msra.mxu0 %v1127
        %1378 = vmatpush.bf16.msra.mxu0 %v1123
        %1379 = vmatmul.bf16.gmra.mxu0 %v509
        %v1380 = vpop.f32.mrf.mxu0
        %v1381 = vadd.f32 %v1367, %v1380
        %v1382 = vpop.f32.mrf.mxu0
        %v1383 = vadd.f32 %v1369, %v1382
        %1384 = vdwg.mxu0
        %1385 = vmatpush.bf16.msra.mxu0 %v1024
        %1386 = vmatpush.bf16.msra.mxu0 %v1020
        %1387 = vmatpush.bf16.msra.mxu0 %v1016
        %1388 = vmatpush.bf16.msra.mxu0 %v1012
        %1389 = vmatpush.bf16.msra.mxu0 %v1008
        %1390 = vmatpush.bf16.msra.mxu0 %v1004
        %1391 = vmatpush.bf16.msra.mxu0 %v1000
        %1392 = vmatpush.bf16.msra.mxu0 %v996
        %1393 = vmatmul.bf16.gmra.mxu0 %v505
        %v1394 = vpop.f32.mrf.mxu0
        %v1395 = vadd.f32 0.0, %v1394
        %v1396 = vpop.f32.mrf.mxu0
        %v1397 = vadd.f32 0.0, %v1396
        %1398 = vdwg.mxu0
        %1399 = vmatpush.bf16.msra.mxu0 %v1056
        %1400 = vmatpush.bf16.msra.mxu0 %v1052
        %1401 = vmatpush.bf16.msra.mxu0 %v1048
        %1402 = vmatpush.bf16.msra.mxu0 %v1044
        %1403 = vmatpush.bf16.msra.mxu0 %v1040
        %1404 = vmatpush.bf16.msra.mxu0 %v1036
        %1405 = vmatpush.bf16.msra.mxu0 %v1032
        %1406 = vmatpush.bf16.msra.mxu0 %v1028
        %1407 = vmatmul.bf16.gmra.mxu0 %v506
        %v1408 = vpop.f32.mrf.mxu0
        %v1409 = vadd.f32 %v1395, %v1408
        %v1410 = vpop.f32.mrf.mxu0
        %v1411 = vadd.f32 %v1397, %v1410
        %1412 = vdwg.mxu0
        %1413 = vmatpush.bf16.msra.mxu0 %v1088
        %1414 = vmatpush.bf16.msra.mxu0 %v1084
        %1415 = vmatpush.bf16.msra.mxu0 %v1080
        %1416 = vmatpush.bf16.msra.mxu0 %v1076
        %1417 = vmatpush.bf16.msra.mxu0 %v1072
        %1418 = vmatpush.bf16.msra.mxu0 %v1068
        %1419 = vmatpush.bf16.msra.mxu0 %v1064
        %1420 = vmatpush.bf16.msra.mxu0 %v1060
        %1421 = vmatmul.bf16.gmra.mxu0 %v507
        %v1422 = vpop.f32.mrf.mxu0
        %v1423 = vadd.f32 %v1409, %v1422
        %v1424 = vpop.f32.mrf.mxu0
        %v1425 = vadd.f32 %v1411, %v1424
        %1426 = vdwg.mxu0
        %1427 = vmatpush.bf16.msra.mxu0 %v1120
        %1428 = vmatpush.bf16.msra.mxu0 %v1116
        %1429 = vmatpush.bf16.msra.mxu0 %v1112
        %1430 = vmatpush.bf16.msra.mxu0 %v1108
        %1431 = vmatpush.bf16.msra.mxu0 %v1104
        %1432 = vmatpush.bf16.msra.mxu0 %v1100
        %1433 = vmatpush.bf16.msra.mxu0 %v1096
        %1434 = vmatpush.bf16.msra.mxu0 %v1092
        %1435 = vmatmul.bf16.gmra.mxu0 %v508
        %v1436 = vpop.f32.mrf.mxu0
        %v1437 = vadd.f32 %v1423, %v1436
        %v1438 = vpop.f32.mrf.mxu0
        %v1439 = vadd.f32 %v1425, %v1438
        %1440 = vdwg.mxu0
        %1441 = vmatpush.bf16.msra.mxu0 %v1152
        %1442 = vmatpush.bf16.msra.mxu0 %v1148
        %1443 = vmatpush.bf16.msra.mxu0 %v1144
        %1444 = vmatpush.bf16.msra.mxu0 %v1140
        %1445 = vmatpush.bf16.msra.mxu0 %v1136
        %1446 = vmatpush.bf16.msra.mxu0 %v1132
        %1447 = vmatpush.bf16.msra.mxu0 %v1128
        %1448 = vmatpush.bf16.msra.mxu0 %v1124
        %1449 = vmatmul.bf16.gmra.mxu0 %v509
        %v1450 = vpop.f32.mrf.mxu0
        %v1451 = vadd.f32 %v1437, %v1450
        %v1452 = vpop.f32.mrf.mxu0
        %v1453 = vadd.f32 %v1439, %v1452
        %1454 = vdwg.mxu0
        %1455 = vmatpush.bf16.msra.mxu0 %v1025
        %1456 = vmatpush.bf16.msra.mxu0 %v1021
        %1457 = vmatpush.bf16.msra.mxu0 %v1017
        %1458 = vmatpush.bf16.msra.mxu0 %v1013
        %1459 = vmatpush.bf16.msra.mxu0 %v1009
        %1460 = vmatpush.bf16.msra.mxu0 %v1005
        %1461 = vmatpush.bf16.msra.mxu0 %v1001
        %1462 = vmatpush.bf16.msra.mxu0 %v997
        %1463 = vmatmul.bf16.gmra.mxu0 %v505
        %v1464 = vpop.f32.mrf.mxu0
        %v1465 = vadd.f32 0.0, %v1464
        %v1466 = vpop.f32.mrf.mxu0
        %v1467 = vadd.f32 0.0, %v1466
        %1468 = vdwg.mxu0
        %1469 = vmatpush.bf16.msra.mxu0 %v1057
        %1470 = vmatpush.bf16.msra.mxu0 %v1053
        %1471 = vmatpush.bf16.msra.mxu0 %v1049
        %1472 = vmatpush.bf16.msra.mxu0 %v1045
        %1473 = vmatpush.bf16.msra.mxu0 %v1041
        %1474 = vmatpush.bf16.msra.mxu0 %v1037
        %1475 = vmatpush.bf16.msra.mxu0 %v1033
        %1476 = vmatpush.bf16.msra.mxu0 %v1029
        %1477 = vmatmul.bf16.gmra.mxu0 %v506
        %v1478 = vpop.f32.mrf.mxu0
        %v1479 = vadd.f32 %v1465, %v1478
        %v1480 = vpop.f32.mrf.mxu0
        %v1481 = vadd.f32 %v1467, %v1480
        %1482 = vdwg.mxu0
        %1483 = vmatpush.bf16.msra.mxu0 %v1089
        %1484 = vmatpush.bf16.msra.mxu0 %v1085
        %1485 = vmatpush.bf16.msra.mxu0 %v1081
        %1486 = vmatpush.bf16.msra.mxu0 %v1077
        %1487 = vmatpush.bf16.msra.mxu0 %v1073
        %1488 = vmatpush.bf16.msra.mxu0 %v1069
        %1489 = vmatpush.bf16.msra.mxu0 %v1065
        %1490 = vmatpush.bf16.msra.mxu0 %v1061
        %1491 = vmatmul.bf16.gmra.mxu0 %v507
        %v1492 = vpop.f32.mrf.mxu0
        %v1493 = vadd.f32 %v1479, %v1492
        %v1494 = vpop.f32.mrf.mxu0
        %v1495 = vadd.f32 %v1481, %v1494
        %1496 = vdwg.mxu0
        %1497 = vmatpush.bf16.msra.mxu0 %v1121
        %1498 = vmatpush.bf16.msra.mxu0 %v1117
        %1499 = vmatpush.bf16.msra.mxu0 %v1113
        %1500 = vmatpush.bf16.msra.mxu0 %v1109
        %1501 = vmatpush.bf16.msra.mxu0 %v1105
        %1502 = vmatpush.bf16.msra.mxu0 %v1101
        %1503 = vmatpush.bf16.msra.mxu0 %v1097
        %1504 = vmatpush.bf16.msra.mxu0 %v1093
        %1505 = vmatmul.bf16.gmra.mxu0 %v508
        %v1506 = vpop.f32.mrf.mxu0
        %v1507 = vadd.f32 %v1493, %v1506
        %v1508 = vpop.f32.mrf.mxu0
        %v1509 = vadd.f32 %v1495, %v1508
        %1510 = vdwg.mxu0
        %1511 = vmatpush.bf16.msra.mxu0 %v1153
        %1512 = vmatpush.bf16.msra.mxu0 %v1149
        %1513 = vmatpush.bf16.msra.mxu0 %v1145
        %1514 = vmatpush.bf16.msra.mxu0 %v1141
        %1515 = vmatpush.bf16.msra.mxu0 %v1137
        %1516 = vmatpush.bf16.msra.mxu0 %v1133
        %1517 = vmatpush.bf16.msra.mxu0 %v1129
        %1518 = vmatpush.bf16.msra.mxu0 %v1125
        %1519 = vmatmul.bf16.gmra.mxu0 %v509
        %v1520 = vpop.f32.mrf.mxu0
        %v1521 = vadd.f32 %v1507, %v1520
        %v1522 = vpop.f32.mrf.mxu0
        %v1523 = vadd.f32 %v1509, %v1522
        %1524 = vdwg.mxu0
        %1525 = vmatpush.bf16.msra.mxu0 %v1026
        %1526 = vmatpush.bf16.msra.mxu0 %v1022
        %1527 = vmatpush.bf16.msra.mxu0 %v1018
        %1528 = vmatpush.bf16.msra.mxu0 %v1014
        %1529 = vmatpush.bf16.msra.mxu0 %v1010
        %1530 = vmatpush.bf16.msra.mxu0 %v1006
        %1531 = vmatpush.bf16.msra.mxu0 %v1002
        %1532 = vmatpush.bf16.msra.mxu0 %v998
        %1533 = vmatmul.bf16.gmra.mxu0 %v505
        %v1534 = vpop.f32.mrf.mxu0
        %v1535 = vadd.f32 0.0, %v1534
        %v1536 = vpop.f32.mrf.mxu0
        %v1537 = vadd.f32 0.0, %v1536
        %1538 = vdwg.mxu0
        %1539 = vmatpush.bf16.msra.mxu0 %v1058
        %1540 = vmatpush.bf16.msra.mxu0 %v1054
        %1541 = vmatpush.bf16.msra.mxu0 %v1050
        %1542 = vmatpush.bf16.msra.mxu0 %v1046
        %1543 = vmatpush.bf16.msra.mxu0 %v1042
        %1544 = vmatpush.bf16.msra.mxu0 %v1038
        %1545 = vmatpush.bf16.msra.mxu0 %v1034
        %1546 = vmatpush.bf16.msra.mxu0 %v1030
        %1547 = vmatmul.bf16.gmra.mxu0 %v506
        %v1548 = vpop.f32.mrf.mxu0
        %v1549 = vadd.f32 %v1535, %v1548
        %v1550 = vpop.f32.mrf.mxu0
        %v1551 = vadd.f32 %v1537, %v1550
        %1552 = vdwg.mxu0
        %1553 = vmatpush.bf16.msra.mxu0 %v1090
        %1554 = vmatpush.bf16.msra.mxu0 %v1086
        %1555 = vmatpush.bf16.msra.mxu0 %v1082
        %1556 = vmatpush.bf16.msra.mxu0 %v1078
        %1557 = vmatpush.bf16.msra.mxu0 %v1074
        %1558 = vmatpush.bf16.msra.mxu0 %v1070
        %1559 = vmatpush.bf16.msra.mxu0 %v1066
        %1560 = vmatpush.bf16.msra.mxu0 %v1062
        %1561 = vmatmul.bf16.gmra.mxu0 %v507
        %v1562 = vpop.f32.mrf.mxu0
        %v1563 = vadd.f32 %v1549, %v1562
        %v1564 = vpop.f32.mrf.mxu0
        %v1565 = vadd.f32 %v1551, %v1564
        %1566 = vdwg.mxu0
        %1567 = vmatpush.bf16.msra.mxu0 %v1122
        %1568 = vmatpush.bf16.msra.mxu0 %v1118
        %1569 = vmatpush.bf16.msra.mxu0 %v1114
        %1570 = vmatpush.bf16.msra.mxu0 %v1110
        %1571 = vmatpush.bf16.msra.mxu0 %v1106
        %1572 = vmatpush.bf16.msra.mxu0 %v1102
        %1573 = vmatpush.bf16.msra.mxu0 %v1098
        %1574 = vmatpush.bf16.msra.mxu0 %v1094
        %1575 = vmatmul.bf16.gmra.mxu0 %v508
        %v1576 = vpop.f32.mrf.mxu0
        %v1577 = vadd.f32 %v1563, %v1576
        %v1578 = vpop.f32.mrf.mxu0
        %v1579 = vadd.f32 %v1565, %v1578
        %1580 = vdwg.mxu0
        %1581 = vmatpush.bf16.msra.mxu0 %v1154
        %1582 = vmatpush.bf16.msra.mxu0 %v1150
        %1583 = vmatpush.bf16.msra.mxu0 %v1146
        %1584 = vmatpush.bf16.msra.mxu0 %v1142
        %1585 = vmatpush.bf16.msra.mxu0 %v1138
        %1586 = vmatpush.bf16.msra.mxu0 %v1134
        %1587 = vmatpush.bf16.msra.mxu0 %v1130
        %1588 = vmatpush.bf16.msra.mxu0 %v1126
        %1589 = vmatmul.bf16.gmra.mxu0 %v509
        %v1590 = vpop.f32.mrf.mxu0
        %v1591 = vadd.f32 %v1577, %v1590
        %v1592 = vpop.f32.mrf.mxu0
        %v1593 = vadd.f32 %v1579, %v1592
        %1594 = vdwg.mxu0
        %v1595 = vadd.f32 %v315, %v1381
        %v1596 = vadd.f32 %v316, %v1451
        %v1597 = vadd.f32 %v317, %v1521
        %v1598 = vadd.f32 %v318, %v1591
        %v1599 = vadd.f32 %v319, %v1383
        %v1600 = vadd.f32 %v320, %v1453
        %v1601 = vadd.f32 %v321, %v1523
        %v1602 = vadd.f32 %v322, %v1593
        %1603 = vst [vmem:[#allocation2] sm:$0xff] %v1595
        %1604 = vst [vmem:[#allocation2 + $0x8] sm:$0xff] %v1596
        %1605 = vst [vmem:[#allocation2 + $0x10] sm:$0xff] %v1597
        %1606 = vst [vmem:[#allocation2 + $0x18] sm:$0xff] %v1598
        %1607 = vst [vmem:[#allocation2 + $0x20] sm:$0xff] %v1599
        %1608 = vst [vmem:[#allocation2 + $0x28] sm:$0xff] %v1600
        %1609 = vst [vmem:[#allocation2 + $0x30] sm:$0xff] %v1601
        %1610 = vst [vmem:[#allocation2 + $0x38] sm:$0xff] %v1602
        %p1611 = scmp.eq.s32.totalorder %s17, 4
        // Predicated region
        $region75: #{tla_forward.1} parent=65 // pred_check
          %p1612 = pneg %p1611
        $region76: #{tla_forward.1} parent=65 // pred_check_branch
          %1614 = sbr.rel (%p1612) target = $region78
        $region77: #{tla_forward.1} parent=65 // pred_region
          %v1615 = vld [vmem:[#allocation2] sm:$0xff]
          %v1616 = vld [vmem:[#allocation2 + $0x8] sm:$0xff]
          %v1617 = vld [vmem:[#allocation2 + $0x10] sm:$0xff]
          %v1618 = vld [vmem:[#allocation2 + $0x18] sm:$0xff]
          %v1619 = vld [vmem:[#allocation2 + $0x20] sm:$0xff]
          %v1620 = vld [vmem:[#allocation2 + $0x28] sm:$0xff]
          %v1621 = vld [vmem:[#allocation2 + $0x30] sm:$0xff]
          %v1622 = vld [vmem:[#allocation2 + $0x38] sm:$0xff]
          %v1623 = vld [vmem:[%s3] sm:$0xf]
          %v1625 = vperm.slane %v1623, 0
          %v1626 = vperm.slane %v1623, 1
          %v1627 = vperm.slane %v1623, 2
          %v1628 = vperm.slane %v1623, 3
          %v1633 = vadd.f32 %v1615, %v1625
          %v1634 = vadd.f32 %v1616, %v1626
          %v1635 = vadd.f32 %v1617, %v1627
          %v1636 = vadd.f32 %v1618, %v1628
          %v1637 = vadd.f32 %v1619, %v1625
          %v1638 = vadd.f32 %v1620, %v1626
          %v1639 = vadd.f32 %v1621, %v1627
          %v1640 = vadd.f32 %v1622, %v1628
          %v1641 = vmax.f32 %v1633, 0.0
          %v1642 = vmax.f32 %v1634, 0.0
          %v1643 = vmax.f32 %v1635, 0.0
          %v1644 = vmax.f32 %v1636, 0.0
          %v1645 = vmax.f32 %v1637, 0.0
          %v1646 = vmax.f32 %v1638, 0.0
          %v1647 = vmax.f32 %v1639, 0.0
          %v1648 = vmax.f32 %v1640, 0.0
          %v1649 = vpack.c.bf16 %v1645, %v1641
          %v1650 = vpack.c.bf16 %v1646, %v1642
          %v1651 = vpack.c.bf16 %v1647, %v1643
          %v1652 = vpack.c.bf16 %v1648, %v1644
          %v1653 = vld [vmem:[%s4] sm:$0xff]
          %v1654 = vld [vmem:[%s4 + $0x8] sm:$0xff]
          %v1655 = vld [vmem:[%s4 + $0x10] sm:$0xff]
          %v1656 = vld [vmem:[%s4 + $0x18] sm:$0xff]
          %v1657 = vld [vmem:[%s4 + $0x20] sm:$0xff]
          %v1658 = vld [vmem:[%s4 + $0x28] sm:$0xff]
          %v1659 = vld [vmem:[%s4 + $0x30] sm:$0xff]
          %v1660 = vld [vmem:[%s4 + $0x38] sm:$0xff]
          %v1661 = vld [vmem:[%s4 + $0x40] sm:$0xff]
          %v1662 = vld [vmem:[%s4 + $0x48] sm:$0xff]
          %v1663 = vld [vmem:[%s4 + $0x50] sm:$0xff]
          %v1664 = vld [vmem:[%s4 + $0x58] sm:$0xff]
          %v1665 = vld [vmem:[%s4 + $0x60] sm:$0xff]
          %v1666 = vld [vmem:[%s4 + $0x68] sm:$0xff]
          %v1667 = vld [vmem:[%s4 + $0x70] sm:$0xff]
          %v1668 = vld [vmem:[%s4 + $0x78] sm:$0xff]
          %v1669 = vld [vmem:[%s4 + $0x80] sm:$0xff]
          %v1670 = vld [vmem:[%s4 + $0x88] sm:$0xff]
          %v1671 = vld [vmem:[%s4 + $0x90] sm:$0xff]
          %v1672 = vld [vmem:[%s4 + $0x98] sm:$0xff]
          %v1673 = vld [vmem:[%s4 + $0xa0] sm:$0xff]
          %v1674 = vld [vmem:[%s4 + $0xa8] sm:$0xff]
          %v1675 = vld [vmem:[%s4 + $0xb0] sm:$0xff]
          %v1676 = vld [vmem:[%s4 + $0xb8] sm:$0xff]
          %v1677 = vld [vmem:[%s4 + $0xc0] sm:$0xff]
          %v1678 = vld [vmem:[%s4 + $0xc8] sm:$0xff]
          %v1679 = vld [vmem:[%s4 + $0xd0] sm:$0xff]
          %v1680 = vld [vmem:[%s4 + $0xd8] sm:$0xff]
          %v1681 = vld [vmem:[%s4 + $0xe0] sm:$0xff]
          %v1682 = vld [vmem:[%s4 + $0xe8] sm:$0xff]
          %v1683 = vld [vmem:[%s4 + $0xf0] sm:$0xff]
          %v1684 = vld [vmem:[%s4 + $0xf8] sm:$0xff]
          %v1685 = vld [vmem:[%s4 + $0x100] sm:$0xff]
          %v1686 = vld [vmem:[%s4 + $0x108] sm:$0xff]
          %v1687 = vld [vmem:[%s4 + $0x110] sm:$0xff]
          %v1688 = vld [vmem:[%s4 + $0x118] sm:$0xff]
          %v1689 = vld [vmem:[%s4 + $0x120] sm:$0xff]
          %v1690 = vld [vmem:[%s4 + $0x128] sm:$0xff]
          %v1691 = vld [vmem:[%s4 + $0x130] sm:$0xff]
          %v1692 = vld [vmem:[%s4 + $0x138] sm:$0xff]
          %v1693 = vld [vmem:[%s4 + $0x140] sm:$0xff]
          %v1694 = vld [vmem:[%s4 + $0x148] sm:$0xff]
          %v1695 = vld [vmem:[%s4 + $0x150] sm:$0xff]
          %v1696 = vld [vmem:[%s4 + $0x158] sm:$0xff]
          %v1697 = vld [vmem:[%s4 + $0x160] sm:$0xff]
          %v1698 = vld [vmem:[%s4 + $0x168] sm:$0xff]
          %v1699 = vld [vmem:[%s4 + $0x170] sm:$0xff]
          %v1700 = vld [vmem:[%s4 + $0x178] sm:$0xff]
          %v1701 = vld [vmem:[%s4 + $0x180] sm:$0xff]
          %v1702 = vld [vmem:[%s4 + $0x188] sm:$0xff]
          %v1703 = vld [vmem:[%s4 + $0x190] sm:$0xff]
          %v1704 = vld [vmem:[%s4 + $0x198] sm:$0xff]
          %v1705 = vld [vmem:[%s4 + $0x1a0] sm:$0xff]
          %v1706 = vld [vmem:[%s4 + $0x1a8] sm:$0xff]
          %v1707 = vld [vmem:[%s4 + $0x1b0] sm:$0xff]
          %v1708 = vld [vmem:[%s4 + $0x1b8] sm:$0xff]
          %v1709 = vld [vmem:[%s4 + $0x1c0] sm:$0xff]
          %v1710 = vld [vmem:[%s4 + $0x1c8] sm:$0xff]
          %v1711 = vld [vmem:[%s4 + $0x1d0] sm:$0xff]
          %v1712 = vld [vmem:[%s4 + $0x1d8] sm:$0xff]
          %v1713 = vld [vmem:[%s4 + $0x1e0] sm:$0xff]
          %v1714 = vld [vmem:[%s4 + $0x1e8] sm:$0xff]
          %v1715 = vld [vmem:[%s4 + $0x1f0] sm:$0xff]
          %v1716 = vld [vmem:[%s4 + $0x1f8] sm:$0xff]
          %v1717 = vld [vmem:[%s5] sm:$0x3]
          %v1719 = vperm.slane %v1717, 0
          %v1720 = vperm.slane %v1717, 1
          %v1787 = vunpack.c.l.b16 %v1653
          %v1788 = vunpack.c.h.b16 %v1653
          %v1789 = vunpack.c.l.b16 %v1654
          %v1790 = vunpack.c.h.b16 %v1654
          %v1791 = vunpack.c.l.b16 %v1655
          %v1792 = vunpack.c.h.b16 %v1655
          %v1793 = vunpack.c.l.b16 %v1656
          %v1794 = vunpack.c.h.b16 %v1656
          %v1795 = vunpack.c.l.b16 %v1657
          %v1796 = vunpack.c.h.b16 %v1657
          %v1797 = vunpack.c.l.b16 %v1658
          %v1798 = vunpack.c.h.b16 %v1658
          %v1799 = vunpack.c.l.b16 %v1659
          %v1800 = vunpack.c.h.b16 %v1659
          %v1801 = vunpack.c.l.b16 %v1660
          %v1802 = vunpack.c.h.b16 %v1660
          %v1803 = vunpack.c.l.b16 %v1661
          %v1804 = vunpack.c.h.b16 %v1661
          %v1805 = vunpack.c.l.b16 %v1662
          %v1806 = vunpack.c.h.b16 %v1662
          %v1807 = vunpack.c.l.b16 %v1663
          %v1808 = vunpack.c.h.b16 %v1663
          %v1809 = vunpack.c.l.b16 %v1664
          %v1810 = vunpack.c.h.b16 %v1664
          %v1811 = vunpack.c.l.b16 %v1665
          %v1812 = vunpack.c.h.b16 %v1665
          %v1813 = vunpack.c.l.b16 %v1666
          %v1814 = vunpack.c.h.b16 %v1666
          %v1815 = vunpack.c.l.b16 %v1667
          %v1816 = vunpack.c.h.b16 %v1667
          %v1817 = vunpack.c.l.b16 %v1668
          %v1818 = vunpack.c.h.b16 %v1668
          %v1819 = vunpack.c.l.b16 %v1669
          %v1820 = vunpack.c.h.b16 %v1669
          %v1821 = vunpack.c.l.b16 %v1670
          %v1822 = vunpack.c.h.b16 %v1670
          %v1823 = vunpack.c.l.b16 %v1671
          %v1824 = vunpack.c.h.b16 %v1671
          %v1825 = vunpack.c.l.b16 %v1672
          %v1826 = vunpack.c.h.b16 %v1672
          %v1827 = vunpack.c.l.b16 %v1673
          %v1828 = vunpack.c.h.b16 %v1673
          %v1829 = vunpack.c.l.b16 %v1674
          %v1830 = vunpack.c.h.b16 %v1674
          %v1831 = vunpack.c.l.b16 %v1675
          %v1832 = vunpack.c.h.b16 %v1675
          %v1833 = vunpack.c.l.b16 %v1676
          %v1834 = vunpack.c.h.b16 %v1676
          %v1835 = vunpack.c.l.b16 %v1677
          %v1836 = vunpack.c.h.b16 %v1677
          %v1837 = vunpack.c.l.b16 %v1678
          %v1838 = vunpack.c.h.b16 %v1678
          %v1839 = vunpack.c.l.b16 %v1679
          %v1840 = vunpack.c.h.b16 %v1679
          %v1841 = vunpack.c.l.b16 %v1680
          %v1842 = vunpack.c.h.b16 %v1680
          %v1843 = vunpack.c.l.b16 %v1681
          %v1844 = vunpack.c.h.b16 %v1681
          %v1845 = vunpack.c.l.b16 %v1682
          %v1846 = vunpack.c.h.b16 %v1682
          %v1847 = vunpack.c.l.b16 %v1683
          %v1848 = vunpack.c.h.b16 %v1683
          %v1849 = vunpack.c.l.b16 %v1684
          %v1850 = vunpack.c.h.b16 %v1684
          %v1851 = vunpack.c.l.b16 %v1685
          %v1852 = vunpack.c.h.b16 %v1685
          %v1853 = vunpack.c.l.b16 %v1686
          %v1854 = vunpack.c.h.b16 %v1686
          %v1855 = vunpack.c.l.b16 %v1687
          %v1856 = vunpack.c.h.b16 %v1687
          %v1857 = vunpack.c.l.b16 %v1688
          %v1858 = vunpack.c.h.b16 %v1688
          %v1859 = vunpack.c.l.b16 %v1689
          %v1860 = vunpack.c.h.b16 %v1689
          %v1861 = vunpack.c.l.b16 %v1690
          %v1862 = vunpack.c.h.b16 %v1690
          %v1863 = vunpack.c.l.b16 %v1691
          %v1864 = vunpack.c.h.b16 %v1691
          %v1865 = vunpack.c.l.b16 %v1692
          %v1866 = vunpack.c.h.b16 %v1692
          %v1867 = vunpack.c.l.b16 %v1693
          %v1868 = vunpack.c.h.b16 %v1693
          %v1869 = vunpack.c.l.b16 %v1694
          %v1870 = vunpack.c.h.b16 %v1694
          %v1871 = vunpack.c.l.b16 %v1695
          %v1872 = vunpack.c.h.b16 %v1695
          %v1873 = vunpack.c.l.b16 %v1696
          %v1874 = vunpack.c.h.b16 %v1696
          %v1875 = vunpack.c.l.b16 %v1697
          %v1876 = vunpack.c.h.b16 %v1697
          %v1877 = vunpack.c.l.b16 %v1698
          %v1878 = vunpack.c.h.b16 %v1698
          %v1879 = vunpack.c.l.b16 %v1699
          %v1880 = vunpack.c.h.b16 %v1699
          %v1881 = vunpack.c.l.b16 %v1700
          %v1882 = vunpack.c.h.b16 %v1700
          %v1883 = vunpack.c.l.b16 %v1701
          %v1884 = vunpack.c.h.b16 %v1701
          %v1885 = vunpack.c.l.b16 %v1702
          %v1886 = vunpack.c.h.b16 %v1702
          %v1887 = vunpack.c.l.b16 %v1703
          %v1888 = vunpack.c.h.b16 %v1703
          %v1889 = vunpack.c.l.b16 %v1704
          %v1890 = vunpack.c.h.b16 %v1704
          %v1891 = vunpack.c.l.b16 %v1705
          %v1892 = vunpack.c.h.b16 %v1705
          %v1893 = vunpack.c.l.b16 %v1706
          %v1894 = vunpack.c.h.b16 %v1706
          %v1895 = vunpack.c.l.b16 %v1707
          %v1896 = vunpack.c.h.b16 %v1707
          %v1897 = vunpack.c.l.b16 %v1708
          %v1898 = vunpack.c.h.b16 %v1708
          %v1899 = vunpack.c.l.b16 %v1709
          %v1900 = vunpack.c.h.b16 %v1709
          %v1901 = vunpack.c.l.b16 %v1710
          %v1902 = vunpack.c.h.b16 %v1710
          %v1903 = vunpack.c.l.b16 %v1711
          %v1904 = vunpack.c.h.b16 %v1711
          %v1905 = vunpack.c.l.b16 %v1712
          %v1906 = vunpack.c.h.b16 %v1712
          %v1907 = vunpack.c.l.b16 %v1713
          %v1908 = vunpack.c.h.b16 %v1713
          %v1909 = vunpack.c.l.b16 %v1714
          %v1910 = vunpack.c.h.b16 %v1714
          %v1911 = vunpack.c.l.b16 %v1715
          %v1912 = vunpack.c.h.b16 %v1715
          %v1913 = vunpack.c.l.b16 %v1716
          %v1914 = vunpack.c.h.b16 %v1716
          %v1915 = vpack.c.b16 %v1789, %v1787
          %v1916 = vpack.c.b16 %v1790, %v1788
          %v1917 = vpack.c.b16 %v1793, %v1791
          %v1918 = vpack.c.b16 %v1794, %v1792
          %v1919 = vpack.c.b16 %v1797, %v1795
          %v1920 = vpack.c.b16 %v1798, %v1796
          %v1921 = vpack.c.b16 %v1801, %v1799
          %v1922 = vpack.c.b16 %v1802, %v1800
          %v1923 = vpack.c.b16 %v1805, %v1803
          %v1924 = vpack.c.b16 %v1806, %v1804
          %v1925 = vpack.c.b16 %v1809, %v1807
          %v1926 = vpack.c.b16 %v1810, %v1808
          %v1927 = vpack.c.b16 %v1813, %v1811
          %v1928 = vpack.c.b16 %v1814, %v1812
          %v1929 = vpack.c.b16 %v1817, %v1815
          %v1930 = vpack.c.b16 %v1818, %v1816
          %v1931 = vpack.c.b16 %v1821, %v1819
          %v1932 = vpack.c.b16 %v1822, %v1820
          %v1933 = vpack.c.b16 %v1825, %v1823
          %v1934 = vpack.c.b16 %v1826, %v1824
          %v1935 = vpack.c.b16 %v1829, %v1827
          %v1936 = vpack.c.b16 %v1830, %v1828
          %v1937 = vpack.c.b16 %v1833, %v1831
          %v1938 = vpack.c.b16 %v1834, %v1832
          %v1939 = vpack.c.b16 %v1837, %v1835
          %v1940 = vpack.c.b16 %v1838, %v1836
          %v1941 = vpack.c.b16 %v1841, %v1839
          %v1942 = vpack.c.b16 %v1842, %v1840
          %v1943 = vpack.c.b16 %v1845, %v1843
          %v1944 = vpack.c.b16 %v1846, %v1844
          %v1945 = vpack.c.b16 %v1849, %v1847
          %v1946 = vpack.c.b16 %v1850, %v1848
          %v1947 = vpack.c.b16 %v1853, %v1851
          %v1948 = vpack.c.b16 %v1854, %v1852
          %v1949 = vpack.c.b16 %v1857, %v1855
          %v1950 = vpack.c.b16 %v1858, %v1856
          %v1951 = vpack.c.b16 %v1861, %v1859
          %v1952 = vpack.c.b16 %v1862, %v1860
          %v1953 = vpack.c.b16 %v1865, %v1863
          %v1954 = vpack.c.b16 %v1866, %v1864
          %v1955 = vpack.c.b16 %v1869, %v1867
          %v1956 = vpack.c.b16 %v1870, %v1868
          %v1957 = vpack.c.b16 %v1873, %v1871
          %v1958 = vpack.c.b16 %v1874, %v1872
          %v1959 = vpack.c.b16 %v1877, %v1875
          %v1960 = vpack.c.b16 %v1878, %v1876
          %v1961 = vpack.c.b16 %v1881, %v1879
          %v1962 = vpack.c.b16 %v1882, %v1880
          %v1963 = vpack.c.b16 %v1885, %v1883
          %v1964 = vpack.c.b16 %v1886, %v1884
          %v1965 = vpack.c.b16 %v1889, %v1887
          %v1966 = vpack.c.b16 %v1890, %v1888
          %v1967 = vpack.c.b16 %v1893, %v1891
          %v1968 = vpack.c.b16 %v1894, %v1892
          %v1969 = vpack.c.b16 %v1897, %v1895
          %v1970 = vpack.c.b16 %v1898, %v1896
          %v1971 = vpack.c.b16 %v1901, %v1899
          %v1972 = vpack.c.b16 %v1902, %v1900
          %v1973 = vpack.c.b16 %v1905, %v1903
          %v1974 = vpack.c.b16 %v1906, %v1904
          %v1975 = vpack.c.b16 %v1909, %v1907
          %v1976 = vpack.c.b16 %v1910, %v1908
          %v1977 = vpack.c.b16 %v1913, %v1911
          %v1978 = vpack.c.b16 %v1914, %v1912
          %2043 = vmatpush.bf16.msra.mxu0 %v1929
          %2044 = vmatpush.bf16.msra.mxu0 %v1927
          %2045 = vmatpush.bf16.msra.mxu0 %v1925
          %2046 = vmatpush.bf16.msra.mxu0 %v1923
          %2047 = vmatpush.bf16.msra.mxu0 %v1921
          %2048 = vmatpush.bf16.msra.mxu0 %v1919
          %2049 = vmatpush.bf16.msra.mxu0 %v1917
          %2050 = vmatpush.bf16.msra.mxu0 %v1915
          %2051 = vmatmul.bf16.gmra.mxu0 %v1649
          %v2052 = vpop.f32.mrf.mxu0
          %v2053 = vadd.f32 %v1719, %v2052
          %v2054 = vpop.f32.mrf.mxu0
          %v2055 = vadd.f32 %v1719, %v2054
          %2056 = vdwg.mxu0
          %2057 = vmatpush.bf16.msra.mxu0 %v1945
          %2058 = vmatpush.bf16.msra.mxu0 %v1943
          %2059 = vmatpush.bf16.msra.mxu0 %v1941
          %2060 = vmatpush.bf16.msra.mxu0 %v1939
          %2061 = vmatpush.bf16.msra.mxu0 %v1937
          %2062 = vmatpush.bf16.msra.mxu0 %v1935
          %2063 = vmatpush.bf16.msra.mxu0 %v1933
          %2064 = vmatpush.bf16.msra.mxu0 %v1931
          %2065 = vmatmul.bf16.gmra.mxu0 %v1650
          %v2066 = vpop.f32.mrf.mxu0
          %v2067 = vadd.f32 %v2053, %v2066
          %v2068 = vpop.f32.mrf.mxu0
          %v2069 = vadd.f32 %v2055, %v2068
          %2070 = vdwg.mxu0
          %2071 = vmatpush.bf16.msra.mxu0 %v1961
          %2072 = vmatpush.bf16.msra.mxu0 %v1959
          %2073 = vmatpush.bf16.msra.mxu0 %v1957
          %2074 = vmatpush.bf16.msra.mxu0 %v1955
          %2075 = vmatpush.bf16.msra.mxu0 %v1953
          %2076 = vmatpush.bf16.msra.mxu0 %v1951
          %2077 = vmatpush.bf16.msra.mxu0 %v1949
          %2078 = vmatpush.bf16.msra.mxu0 %v1947
          %2079 = vmatmul.bf16.gmra.mxu0 %v1651
          %v2080 = vpop.f32.mrf.mxu0
          %v2081 = vadd.f32 %v2067, %v2080
          %v2082 = vpop.f32.mrf.mxu0
          %v2083 = vadd.f32 %v2069, %v2082
          %2084 = vdwg.mxu0
          %2085 = vmatpush.bf16.msra.mxu0 %v1977
          %2086 = vmatpush.bf16.msra.mxu0 %v1975
          %2087 = vmatpush.bf16.msra.mxu0 %v1973
          %2088 = vmatpush.bf16.msra.mxu0 %v1971
          %2089 = vmatpush.bf16.msra.mxu0 %v1969
          %2090 = vmatpush.bf16.msra.mxu0 %v1967
          %2091 = vmatpush.bf16.msra.mxu0 %v1965
          %2092 = vmatpush.bf16.msra.mxu0 %v1963
          %2093 = vmatmul.bf16.gmra.mxu0 %v1652
          %v2094 = vpop.f32.mrf.mxu0
          %v2095 = vadd.f32 %v2081, %v2094
          %v2096 = vpop.f32.mrf.mxu0
          %v2097 = vadd.f32 %v2083, %v2096
          %2098 = vdwg.mxu0
          %2099 = vmatpush.bf16.msra.mxu0 %v1930
          %2100 = vmatpush.bf16.msra.mxu0 %v1928
          %2101 = vmatpush.bf16.msra.mxu0 %v1926
          %2102 = vmatpush.bf16.msra.mxu0 %v1924
          %2103 = vmatpush.bf16.msra.mxu0 %v1922
          %2104 = vmatpush.bf16.msra.mxu0 %v1920
          %2105 = vmatpush.bf16.msra.mxu0 %v1918
          %2106 = vmatpush.bf16.msra.mxu0 %v1916
          %2107 = vmatmul.bf16.gmra.mxu0 %v1649
          %v2108 = vpop.f32.mrf.mxu0
          %v2109 = vadd.f32 %v1720, %v2108
          %v2110 = vpop.f32.mrf.mxu0
          %v2111 = vadd.f32 %v1720, %v2110
          %2112 = vdwg.mxu0
          %2113 = vmatpush.bf16.msra.mxu0 %v1946
          %2114 = vmatpush.bf16.msra.mxu0 %v1944
          %2115 = vmatpush.bf16.msra.mxu0 %v1942
          %2116 = vmatpush.bf16.msra.mxu0 %v1940
          %2117 = vmatpush.bf16.msra.mxu0 %v1938
          %2118 = vmatpush.bf16.msra.mxu0 %v1936
          %2119 = vmatpush.bf16.msra.mxu0 %v1934
          %2120 = vmatpush.bf16.msra.mxu0 %v1932
          %2121 = vmatmul.bf16.gmra.mxu0 %v1650
          %v2122 = vpop.f32.mrf.mxu0
          %v2123 = vadd.f32 %v2109, %v2122
          %v2124 = vpop.f32.mrf.mxu0
          %v2125 = vadd.f32 %v2111, %v2124
          %2126 = vdwg.mxu0
          %2127 = vmatpush.bf16.msra.mxu0 %v1962
          %2128 = vmatpush.bf16.msra.mxu0 %v1960
          %2129 = vmatpush.bf16.msra.mxu0 %v1958
          %2130 = vmatpush.bf16.msra.mxu0 %v1956
          %2131 = vmatpush.bf16.msra.mxu0 %v1954
          %2132 = vmatpush.bf16.msra.mxu0 %v1952
          %2133 = vmatpush.bf16.msra.mxu0 %v1950
          %2134 = vmatpush.bf16.msra.mxu0 %v1948
          %2135 = vmatmul.bf16.gmra.mxu0 %v1651
          %v2136 = vpop.f32.mrf.mxu0
          %v2137 = vadd.f32 %v2123, %v2136
          %v2138 = vpop.f32.mrf.mxu0
          %v2139 = vadd.f32 %v2125, %v2138
          %2140 = vdwg.mxu0
          %2141 = vmatpush.bf16.msra.mxu0 %v1978
          %2142 = vmatpush.bf16.msra.mxu0 %v1976
          %2143 = vmatpush.bf16.msra.mxu0 %v1974
          %2144 = vmatpush.bf16.msra.mxu0 %v1972
          %2145 = vmatpush.bf16.msra.mxu0 %v1970
          %2146 = vmatpush.bf16.msra.mxu0 %v1968
          %2147 = vmatpush.bf16.msra.mxu0 %v1966
          %2148 = vmatpush.bf16.msra.mxu0 %v1964
          %2149 = vmatmul.bf16.gmra.mxu0 %v1652
          %v2150 = vpop.f32.mrf.mxu0
          %v2151 = vadd.f32 %v2137, %v2150
          %v2152 = vpop.f32.mrf.mxu0
          %v2153 = vadd.f32 %v2139, %v2152
          %2154 = vdwg.mxu0
          %v2155 = vld [vmem:[%s1] sm:$0xff]
          %v2156 = vld [vmem:[%s1 + $0x8] sm:$0xff]
          %v2157 = vmul.f32 %v2095, %v2155
          %v2158 = vmul.f32 %v2097, %v2156
          %v2159 = vadd.f32 %v2157, %v2151
          %v2160 = vadd.f32 %v2158, %v2153
          %2161 = vst [vmem:[%s6] sm:$0xff] %v2159
          %2162 = vst [vmem:[%s6 + $0x8] sm:$0xff] %v2160
        $region78: #{tla_forward.1} parent=65 // pred_fallthru
          _
        // Predicated region
        $region79: #{tla_forward.1} parent=65 // pred_check
          %p2163 = pneg %p166
        $region80: #{tla_forward.1} parent=65 // pred_check_branch
          %2165 = sbr.rel (%p2163) target = $region82
        $region81: #{tla_forward.1} parent=65 // pred_region
          _
        $region82: #{tla_forward.1} parent=65 // pred_fallthru
          _
        // Predicated region
        $region83: #{tla_forward.1} parent=65 // pred_check
          %p2166 = pneg %p166
        $region84: #{tla_forward.1} parent=65 // pred_check_branch
          %2168 = sbr.rel (%p2166) target = $region86
        $region85: #{tla_forward.1} parent=65 // pred_region
          _
        $region86: #{tla_forward.1} parent=65 // pred_fallthru
          _
      $region66: #{tla_forward.1} parent=5 // pred_fallthru
        _
      %p2169 = scmp.le.s32.totalorder 2, %s12
      // Predicated region
      $region87: #{tla_forward.1} parent=5 // pred_check
        %p2170 = pneg %p2169
      $region88: #{tla_forward.1} parent=5 // pred_check_branch
        %2172 = sbr.rel (%p2170) target = $region90
      $region89: #{tla_forward.1} parent=5 // pred_region
        %s2173 = ssub.s32 %s12, 2
      $region90: #{tla_forward.1} parent=5 // pred_fallthru
        _
    $region6: #{tla_forward.1} parent=1 // loop_footer
      %s16 = sadd.s32 1, %s12
    $region7: #{tla_forward.1} parent=1 // loop_footer_branch
      %11 = sbr.rel target = $region3
    $region8: #{tla_forward.1} parent=1 // loop_exit
      _

</llo_original>
